<compile_context>
chip_gen: v7x
topology: tpu7x:2x2x1
jax: 0.10.0
libtpu: 0.0.40
codegen_flags: <defaults>
</compile_context>

<pallas_src>
import functools

import jax
import jax.numpy as jnp
from jax import lax
from jax.experimental import pallas as pl
from jax.experimental.pallas import tpu as pltpu

EPS = 1e-5  # nn.LayerNorm default eps
_INV_SQRT2 = 0.7071067811865476

_WEIGHT_IDX = (2, 4, 6, 8, 12, 14)  # wq, wk, wv, wp, wf1, wf2 within params tuple


def _layernorm(z, g, b):
    mu = jnp.mean(z, axis=-1, keepdims=True)
    var = jnp.mean((z - mu) ** 2, axis=-1, keepdims=True)
    return (z - mu) * lax.rsqrt(var + EPS) * g + b


def _gelu(h, approx):
    if approx:
        # Optional tanh approximation -> EUP slot (frees VALU); off by default to
        # preserve nn.GELU() exact-erf semantics.
        return jax.nn.gelu(h, approximate=True)
    return 0.5 * h * (1.0 + lax.erf(h * _INV_SQRT2))


def decoder_block_kernel(
    x_ref, enc_ref,
    g1_ref, b1_ref,
    wq_ref, bq_ref, wk_ref, bk_ref, wv_ref, bv_ref,
    wp_ref, bp_ref,
    g2_ref, b2_ref,
    wf1_ref, bf1_ref, wf2_ref, bf2_ref,
    o_ref,
    ctx_ref,
    *, num_heads, inv_scaling, ffn_chunk, gelu_approx,
):
    Bt, Nq, Dd = x_ref.shape
    _, Nk, De = enc_ref.shape
    hd = Dd // num_heads
    Dh = wf1_ref.shape[1]
    rows_q = Bt * Nq
    rows_k = Bt * Nk

    # Flatten (batch-tile, seq) -> rows so projections feed the MXU with Bt*Nq
    # (resp. Bt*Nk) rows per pass.
    x = x_ref[...].astype(jnp.float32).reshape(rows_q, Dd)
    enc = enc_ref[...].astype(jnp.float32).reshape(rows_k, De)

    # ---- norm1 + cross attention ----
    xn = _layernorm(x, g1_ref[...], b1_ref[...])

    # bf16 MXU inputs, f32 accumulation; bias adds and q pre-scaling stay f32.
    xn_b = xn.astype(jnp.bfloat16)
    enc_b = enc.astype(jnp.bfloat16)
    q = (jnp.dot(xn_b, wq_ref[...], preferred_element_type=jnp.float32)
         + bq_ref[...]) * inv_scaling                      # pre-scale q once
    k = jnp.dot(enc_b, wk_ref[...], preferred_element_type=jnp.float32) + bk_ref[...]
    v = jnp.dot(enc_b, wv_ref[...], preferred_element_type=jnp.float32) + bv_ref[...]

    q = q.astype(jnp.bfloat16).reshape(Bt, Nq, Dd)
    k = k.astype(jnp.bfloat16).reshape(Bt, Nk, Dd)
    v = v.astype(jnp.bfloat16).reshape(Bt, Nk, Dd)

    # Per-head attention (static unroll over heads, batched over Bt).  Each
    # head's bf16 context is written into the matching lane slice of the VMEM
    # scratch, so the output projection below is a single K=Dd matmul.
    # TODO(synk): when Mosaic multi-batch-dim dot_general is confirmed on the
    # target jax build, fuse heads into one 'bqhd,bkhd->bhqk' einsum.
    for h in range(num_heads):
        sl = slice(h * hd, (h + 1) * hd)
        e = jnp.einsum('bqd,bkd->bqk', q[:, :, sl], k[:, :, sl],
                       preferred_element_type=jnp.float32)   # (Bt, Nq, Nk)
        e = e - jnp.max(e, axis=-1, keepdims=True)
        p = jnp.exp(e)
        p = p * pl.reciprocal(jnp.sum(p, axis=-1, keepdims=True), approx=True)
        ctx = jnp.einsum('bqk,bkd->bqd', p.astype(jnp.bfloat16), v[:, :, sl],
                         preferred_element_type=jnp.float32)  # (Bt, Nq, hd)
        ctx_ref[:, :, sl] = ctx.astype(jnp.bfloat16)

    proj = (jnp.dot(ctx_ref[...].reshape(rows_q, Dd), wp_ref[...],
                    preferred_element_type=jnp.float32) + bp_ref[...])

    x1 = proj + x  # drop1 identity at inference; residual add (f32)

    # ---- block2: LayerNorm -> Linear -> GELU -> Linear, tiled over hidden ----
    x2n = _layernorm(x1, g2_ref[...], b2_ref[...]).astype(jnp.bfloat16)
    y = jnp.zeros((rows_q, Dd), jnp.float32)
    for c0 in range(0, Dh, ffn_chunk):  # static chunking bounds rows x Dh live set
        c1 = min(c0 + ffn_chunk, Dh)
        hmid = (jnp.dot(x2n, wf1_ref[:, c0:c1],
                        preferred_element_type=jnp.float32) + bf1_ref[:, c0:c1])
        hmid = _gelu(hmid, gelu_approx)
        y = y + jnp.dot(hmid.astype(jnp.bfloat16), wf2_ref[c0:c1, :],
                        preferred_element_type=jnp.float32)
    y = y + bf2_ref[...]

    o_ref[...] = (y + x1).reshape(Bt, Nq, Dd).astype(o_ref.dtype)


def _pick_batch_tile(B, Nq, target_rows=512, min_grid=2):
    """Largest divisor of B with bt*Nq <= target_rows, keeping grid >= min_grid.

    min_grid=2 keeps the "parallel" batch axis shardable across both v7x
    TensorCores; it is moot (tiny per-step overhead) on v5e/v6e.
    """
    bt = max(1, min(B, max(1, target_rows // max(1, Nq))))
    while B % bt:
        bt -= 1
    while bt > 1 and (B // bt) < min_grid:
        bt -= 1
        while B % bt:
            bt -= 1
    return bt


def decoder_block(x, enc_output, params, num_heads, *, batch_tile=None,
                  target_rows=512, ffn_chunk=None, gelu_approx=False):
    B, Nq, Dd = x.shape
    _, Nk, De = enc_output.shape
    assert Dd % num_heads == 0
    Dh = params[12].shape[1]
    scaling = Dd ** 1 / 2  # reproduce PyTorch expression exactly (== Dd / 2)
    inv_scaling = 1.0 / scaling

    bt = batch_tile if batch_tile is not None else _pick_batch_tile(B, Nq, target_rows)
    assert B % bt == 0, "batch tile must divide batch"

    if ffn_chunk is None:
        ffn_chunk = Dh if Dh <= 2048 else 2048  # bound rows x hidden live set

    # Matmul weights stored bf16 (bf16 MXU rate, half VMEM/HBM bytes); LayerNorm
    # params and biases stay f32 (applied after f32 accumulation).
    kargs = [a.astype(jnp.bfloat16) if i in _WEIGHT_IDX else a
             for i, a in enumerate(params)]

    kernel = functools.partial(
        decoder_block_kernel, num_heads=num_heads, inv_scaling=inv_scaling,
        ffn_chunk=ffn_chunk, gelu_approx=gelu_approx)

    # Whole-array VMEM residency: no block_shape/index_map -> single copy, not
    # routed through the double-buffered block pipeline.
    weight_specs = [pl.BlockSpec(memory_space=pltpu.MemorySpace.VMEM)
                    for _ in kargs]

    # VMEM budget per chip generation: resident weights + double-buffered
    # x/enc/out blocks + rough per-step intermediates, capped below physical VMEM.
    weight_bytes = sum(int(a.size) * a.dtype.itemsize for a in kargs)
    block_bytes = 2 * 4 * (bt * Nq * Dd * 2 + bt * Nk * De)
    interm_bytes = 4 * (bt * Nq * (6 * Dd + 2 * ffn_chunk + 2 * Nk)
                        + bt * Nk * 3 * Dd)
    try:
        vmem_cap = int(pltpu.get_tpu_info().vmem_capacity_bytes)
    except Exception:
        vmem_cap = 64 * 1024 * 1024
    vmem_limit = int(min(0.8 * vmem_cap,
                         max(32 * 1024 * 1024,
                             1.3 * (weight_bytes + block_bytes + interm_bytes))))

    H = num_heads
    flops = 2 * B * (Nq * Dd * Dd            # q projection
                     + 2 * Nk * De * Dd      # k, v projections
                     + 2 * Nq * Nk * Dd      # scores + context (summed over heads)
                     + Nq * Dd * Dd          # output projection
                     + 2 * Nq * Dd * Dh)     # FFN
    transcendentals = B * (H * Nq * Nk + Nq * Dh)   # exp + erf
    bytes_accessed = 4 * (2 * B * Nq * Dd + B * Nk * De) + weight_bytes

    return pl.pallas_call(
        kernel,
        out_shape=jax.ShapeDtypeStruct((B, Nq, Dd), x.dtype),
        grid=(B // bt,),
        in_specs=[
            pl.BlockSpec((bt, Nq, Dd), lambda b: (b, 0, 0)),
            pl.BlockSpec((bt, Nk, De), lambda b: (b, 0, 0)),
        ] + weight_specs,
        out_specs=pl.BlockSpec((bt, Nq, Dd), lambda b: (b, 0, 0)),
        scratch_shapes=[pltpu.VMEM((bt, Nq, Dd), jnp.bfloat16)],
        compiler_params=pltpu.CompilerParams(
            dimension_semantics=("parallel",),
            vmem_limit_bytes=vmem_limit,
        ),
        cost_estimate=pl.CostEstimate(
            flops=flops, transcendentals=transcendentals,
            bytes_accessed=bytes_accessed),
    )(x, enc_output, *kargs)


def reference_decoder_block(x, enc, params, num_heads):
    """Pure-JAX f32 reference (mirrors the PyTorch forward in eval mode)."""
    (g1, b1, wq, bq, wk, bk, wv, bv, wp, bp, g2, b2, wf1, bf1, wf2, bf2) = params
    B, Nq, Dd = x.shape
    hd = Dd // num_heads

    xn = _layernorm(x, g1, b1)
    q = xn @ wq + bq
    k = enc @ wk + bk
    v = enc @ wv + bv
    q = q.reshape(B, Nq, num_heads, hd).transpose(0, 2, 1, 3)
    k = k.reshape(B, -1, num_heads, hd).transpose(0, 2, 1, 3)
    v = v.reshape(B, -1, num_heads, hd).transpose(0, 2, 1, 3)
    e = jnp.einsum('bhqd,bhkd->bhqk', q, k) / (Dd ** 1 / 2)
    p = jax.nn.softmax(e, axis=-1)
    o = jnp.einsum('bhqk,bhkd->bhqd', p, v).transpose(0, 2, 1, 3).reshape(B, Nq, Dd)
    proj = o @ wp + bp
    x1 = proj + x
    x2n = _layernorm(x1, g2, b2)
    h = x2n @ wf1 + bf1
    h = 0.5 * h * (1.0 + lax.erf(h * _INV_SQRT2))
    y = h @ wf2 + bf2
    return y + x1


def init_params(key, enc_emb_dim, dec_emb_dim, expansion=4):
    """Deterministic synthetic parameters (shapes from the module __init__)."""
    ks = jax.random.split(key, 16)
    s = 0.05

    def lin(kk, fan_in, fan_out):
        kw, kb = jax.random.split(kk)
        w = s * jax.random.normal(kw, (fan_in, fan_out), jnp.float32)
        b = s * jax.random.normal(kb, (1, fan_out), jnp.float32)
        return w, b

    g1 = 1.0 + 0.1 * jax.random.normal(ks[0], (1, dec_emb_dim), jnp.float32)
    b1 = 0.1 * jax.random.normal(ks[1], (1, dec_emb_dim), jnp.float32)
    wq, bq = lin(ks[2], dec_emb_dim, dec_emb_dim)
    wk, bk = lin(ks[3], enc_emb_dim, dec_emb_dim)
    wv, bv = lin(ks[4], enc_emb_dim, dec_emb_dim)
    wp, bp = lin(ks[5], dec_emb_dim, dec_emb_dim)
    g2 = 1.0 + 0.1 * jax.random.normal(ks[6], (1, dec_emb_dim), jnp.float32)
    b2 = 0.1 * jax.random.normal(ks[7], (1, dec_emb_dim), jnp.float32)
    wf1, bf1 = lin(ks[8], dec_emb_dim, dec_emb_dim * expansion)
    wf2, bf2 = lin(ks[9], dec_emb_dim * expansion, dec_emb_dim)
    return (g1, b1, wq, bq, wk, bk, wv, bv, wp, bp, g2, b2, wf1, bf1, wf2, bf2)


if __name__ == "__main__":
    # Small shapes consistent with the module's forward:
    #   x: (B, Nq, dec_emb_dim), enc_output: (B, Nk, enc_emb_dim)
    B, Nq, Nk = 2, 8, 8
    enc_emb_dim, dec_emb_dim, num_heads = 16, 32, 4

    key = jax.random.PRNGKey(0)
    kx, ke, kp = jax.random.split(key, 3)
    x = jax.random.normal(kx, (B, Nq, dec_emb_dim), jnp.float32)
    enc_output = jax.random.normal(ke, (B, Nk, enc_emb_dim), jnp.float32)
    params = init_params(kp, enc_emb_dim, dec_emb_dim)

    out = decoder_block(x, enc_output, params, num_heads)
    out = jax.block_until_ready(out)

    ref = reference_decoder_block(x, enc_output, params, num_heads)
    assert out.shape == (B, Nq, dec_emb_dim)
    # Tolerance loosened vs. a pure-f32 run: matmuls use bf16 inputs (f32
    # accumulate) and the softmax normalization uses the EUP approx reciprocal.
    assert jnp.allclose(out, ref, atol=2e-2, rtol=2e-2), "mismatch vs JAX reference"

    print("KERNEL_OK")
</pallas_src>

<mosaic_0001>
module attributes {stable_mosaic.version = 11 : i64} {
  func.func @decoder_block_kernel(%arg0: i32, %arg1: memref<1x8x32xf32, #tpu.memory_space<vmem>>, %arg2: memref<1x8x16xf32, #tpu.memory_space<vmem>>, %arg3: memref<1x32xf32, #tpu.memory_space<vmem>>, %arg4: memref<1x32xf32, #tpu.memory_space<vmem>>, %arg5: memref<32x32xbf16, #tpu.memory_space<vmem>>, %arg6: memref<1x32xf32, #tpu.memory_space<vmem>>, %arg7: memref<16x32xbf16, #tpu.memory_space<vmem>>, %arg8: memref<1x32xf32, #tpu.memory_space<vmem>>, %arg9: memref<16x32xbf16, #tpu.memory_space<vmem>>, %arg10: memref<1x32xf32, #tpu.memory_space<vmem>>, %arg11: memref<32x32xbf16, #tpu.memory_space<vmem>>, %arg12: memref<1x32xf32, #tpu.memory_space<vmem>>, %arg13: memref<1x32xf32, #tpu.memory_space<vmem>>, %arg14: memref<1x32xf32, #tpu.memory_space<vmem>>, %arg15: memref<32x128xbf16, #tpu.memory_space<vmem>>, %arg16: memref<1x128xf32, #tpu.memory_space<vmem>>, %arg17: memref<128x32xbf16, #tpu.memory_space<vmem>>, %arg18: memref<1x32xf32, #tpu.memory_space<vmem>>, %arg19: memref<1x8x32xf32, #tpu.memory_space<vmem>>, %arg20: memref<1x8x32xbf16, #tpu.memory_space<vmem>>) attributes {dimension_semantics = [#tpu.dimension_semantics<parallel>], iteration_bounds = array<i64: 2>, scalar_prefetch = 0 : i64, scratch_operands = 1 : i64, tpu.core_type = #tpu.core_type<tc>, window_params = [{transform_indices = @transform_0, window_bounds = array<i64: 1, 8, 32>}, {transform_indices = @transform_1, window_bounds = array<i64: 1, 8, 16>}, {pipeline_mode = #tpu.pipeline_mode<synchronous>, transform_indices = @transform_2, window_bounds = array<i64: 1, 32>}, {pipeline_mode = #tpu.pipeline_mode<synchronous>, transform_indices = @transform_3, window_bounds = array<i64: 1, 32>}, {pipeline_mode = #tpu.pipeline_mode<synchronous>, transform_indices = @transform_4, window_bounds = array<i64: 32, 32>}, {pipeline_mode = #tpu.pipeline_mode<synchronous>, transform_indices = @transform_5, window_bounds = array<i64: 1, 32>}, {pipeline_mode = #tpu.pipeline_mode<synchronous>, transform_indices = @transform_6, window_bounds = array<i64: 16, 32>}, {pipeline_mode = #tpu.pipeline_mode<synchronous>, transform_indices = @transform_7, window_bounds = array<i64: 1, 32>}, {pipeline_mode = #tpu.pipeline_mode<synchronous>, transform_indices = @transform_8, window_bounds = array<i64: 16, 32>}, {pipeline_mode = #tpu.pipeline_mode<synchronous>, transform_indices = @transform_9, window_bounds = array<i64: 1, 32>}, {pipeline_mode = #tpu.pipeline_mode<synchronous>, transform_indices = @transform_10, window_bounds = array<i64: 32, 32>}, {pipeline_mode = #tpu.pipeline_mode<synchronous>, transform_indices = @transform_11, window_bounds = array<i64: 1, 32>}, {pipeline_mode = #tpu.pipeline_mode<synchronous>, transform_indices = @transform_12, window_bounds = array<i64: 1, 32>}, {pipeline_mode = #tpu.pipeline_mode<synchronous>, transform_indices = @transform_13, window_bounds = array<i64: 1, 32>}, {pipeline_mode = #tpu.pipeline_mode<synchronous>, transform_indices = @transform_14, window_bounds = array<i64: 32, 128>}, {pipeline_mode = #tpu.pipeline_mode<synchronous>, transform_indices = @transform_15, window_bounds = array<i64: 1, 128>}, {pipeline_mode = #tpu.pipeline_mode<synchronous>, transform_indices = @transform_16, window_bounds = array<i64: 128, 32>}, {pipeline_mode = #tpu.pipeline_mode<synchronous>, transform_indices = @transform_17, window_bounds = array<i64: 1, 32>}, {transform_indices = @transform_18, window_bounds = array<i64: 1, 8, 32>}]} {
    %c0 = arith.constant 0 : index
    %c0_0 = arith.constant 0 : index
    %c0_1 = arith.constant 0 : index
    %0 = vector.load %arg1[%c0, %c0_0, %c0_1] : memref<1x8x32xf32, #tpu.memory_space<vmem>>, vector<1x8x32xf32>
    %1 = vector.shape_cast %0 : vector<1x8x32xf32> to vector<8x32xf32>
    %c0_2 = arith.constant 0 : index
    %c0_3 = arith.constant 0 : index
    %c0_4 = arith.constant 0 : index
    %2 = vector.load %arg2[%c0_2, %c0_3, %c0_4] : memref<1x8x16xf32, #tpu.memory_space<vmem>>, vector<1x8x16xf32>
    %3 = vector.shape_cast %2 : vector<1x8x16xf32> to vector<8x16xf32>
    %c0_5 = arith.constant 0 : index
    %c0_6 = arith.constant 0 : index
    %4 = vector.load %arg3[%c0_5, %c0_6] : memref<1x32xf32, #tpu.memory_space<vmem>>, vector<1x32xf32>
    %c0_7 = arith.constant 0 : index
    %c0_8 = arith.constant 0 : index
    %5 = vector.load %arg4[%c0_7, %c0_8] : memref<1x32xf32, #tpu.memory_space<vmem>>, vector<1x32xf32>
    %cst = arith.constant dense<0.000000e+00> : vector<8xf32>
    %6 = vector.multi_reduction <add>, %1, %cst [1] : vector<8x32xf32> to vector<8xf32>
    %7 = vector.shape_cast %6 : vector<8xf32> to vector<8x1xf32>
    %cst_9 = arith.constant 3.200000e+01 : f32
    %8 = vector.broadcast %cst_9 : f32 to vector<8x1xf32>
    %9 = arith.divf %7, %8 : vector<8x1xf32>
    %10 = vector.broadcast %9 : vector<8x1xf32> to vector<8x32xf32>
    %11 = arith.subf %1, %10 : vector<8x32xf32>
    %12 = arith.mulf %11, %11 : vector<8x32xf32>
    %cst_10 = arith.constant dense<0.000000e+00> : vector<8xf32>
    %13 = vector.multi_reduction <add>, %12, %cst_10 [1] : vector<8x32xf32> to vector<8xf32>
    %14 = vector.shape_cast %13 : vector<8xf32> to vector<8x1xf32>
    %cst_11 = arith.constant 3.200000e+01 : f32
    %15 = vector.broadcast %cst_11 : f32 to vector<8x1xf32>
    %16 = arith.divf %14, %15 : vector<8x1xf32>
    %17 = vector.broadcast %9 : vector<8x1xf32> to vector<8x32xf32>
    %18 = arith.subf %1, %17 : vector<8x32xf32>
    %cst_12 = arith.constant 9.99999974E-6 : f32
    %19 = vector.broadcast %cst_12 : f32 to vector<8x1xf32>
    %20 = arith.addf %16, %19 : vector<8x1xf32>
    %21 = math.rsqrt %20 : vector<8x1xf32>
    %22 = vector.broadcast %21 : vector<8x1xf32> to vector<8x32xf32>
    %23 = arith.mulf %18, %22 : vector<8x32xf32>
    %24 = vector.broadcast %4 : vector<1x32xf32> to vector<8x32xf32>
    %25 = arith.mulf %23, %24 : vector<8x32xf32>
    %26 = vector.broadcast %5 : vector<1x32xf32> to vector<8x32xf32>
    %27 = arith.addf %25, %26 : vector<8x32xf32>
    %28 = arith.truncf %27 : vector<8x32xf32> to vector<8x32xbf16>
    %29 = arith.truncf %3 : vector<8x16xf32> to vector<8x16xbf16>
    %c0_13 = arith.constant 0 : index
    %c0_14 = arith.constant 0 : index
    %30 = vector.load %arg5[%c0_13, %c0_14] : memref<32x32xbf16, #tpu.memory_space<vmem>>, vector<32x32xbf16>
    %cst_15 = arith.constant dense<0.000000e+00> : vector<8x32xf32>
    %31 = tpu.matmul %28, %30, %cst_15 {dimension_numbers = #tpu.dot_dimension_numbers<[1], [0], [0], [1], [0, 0, 1, 1], [], []>} : vector<8x32xbf16>, vector<32x32xbf16>, vector<8x32xf32> -> vector<8x32xf32>
    %c0_16 = arith.constant 0 : index
    %c0_17 = arith.constant 0 : index
    %32 = vector.load %arg6[%c0_16, %c0_17] : memref<1x32xf32, #tpu.memory_space<vmem>>, vector<1x32xf32>
    %33 = vector.broadcast %32 : vector<1x32xf32> to vector<8x32xf32>
    %34 = arith.addf %31, %33 : vector<8x32xf32>
    %cst_18 = arith.constant 6.250000e-02 : f32
    %35 = vector.broadcast %cst_18 : f32 to vector<8x32xf32>
    %36 = arith.mulf %34, %35 : vector<8x32xf32>
    %c0_19 = arith.constant 0 : index
    %c0_20 = arith.constant 0 : index
    %37 = vector.load %arg7[%c0_19, %c0_20] : memref<16x32xbf16, #tpu.memory_space<vmem>>, vector<16x32xbf16>
    %cst_21 = arith.constant dense<0.000000e+00> : vector<8x32xf32>
    %38 = tpu.matmul %29, %37, %cst_21 {dimension_numbers = #tpu.dot_dimension_numbers<[1], [0], [0], [1], [0, 0, 1, 1], [], []>} : vector<8x16xbf16>, vector<16x32xbf16>, vector<8x32xf32> -> vector<8x32xf32>
    %c0_22 = arith.constant 0 : index
    %c0_23 = arith.constant 0 : index
    %39 = vector.load %arg8[%c0_22, %c0_23] : memref<1x32xf32, #tpu.memory_space<vmem>>, vector<1x32xf32>
    %40 = vector.broadcast %39 : vector<1x32xf32> to vector<8x32xf32>
    %41 = arith.addf %38, %40 : vector<8x32xf32>
    %c0_24 = arith.constant 0 : index
    %c0_25 = arith.constant 0 : index
    %42 = vector.load %arg9[%c0_24, %c0_25] : memref<16x32xbf16, #tpu.memory_space<vmem>>, vector<16x32xbf16>
    %cst_26 = arith.constant dense<0.000000e+00> : vector<8x32xf32>
    %43 = tpu.matmul %29, %42, %cst_26 {dimension_numbers = #tpu.dot_dimension_numbers<[1], [0], [0], [1], [0, 0, 1, 1], [], []>} : vector<8x16xbf16>, vector<16x32xbf16>, vector<8x32xf32> -> vector<8x32xf32>
    %c0_27 = arith.constant 0 : index
    %c0_28 = arith.constant 0 : index
    %44 = vector.load %arg10[%c0_27, %c0_28] : memref<1x32xf32, #tpu.memory_space<vmem>>, vector<1x32xf32>
    %45 = vector.broadcast %44 : vector<1x32xf32> to vector<8x32xf32>
    %46 = arith.addf %43, %45 : vector<8x32xf32>
    %47 = arith.truncf %36 : vector<8x32xf32> to vector<8x32xbf16>
    %48 = vector.shape_cast %47 : vector<8x32xbf16> to vector<1x8x32xbf16>
    %49 = arith.truncf %41 : vector<8x32xf32> to vector<8x32xbf16>
    %50 = vector.shape_cast %49 : vector<8x32xbf16> to vector<1x8x32xbf16>
    %51 = arith.truncf %46 : vector<8x32xf32> to vector<8x32xbf16>
    %52 = vector.shape_cast %51 : vector<8x32xbf16> to vector<1x8x32xbf16>
    %53 = vector.extract_strided_slice %48 {offsets = [0, 0, 0], sizes = [1, 8, 8], strides = [1, 1, 1]} : vector<1x8x32xbf16> to vector<1x8x8xbf16>
    %54 = vector.extract_strided_slice %50 {offsets = [0, 0, 0], sizes = [1, 8, 8], strides = [1, 1, 1]} : vector<1x8x32xbf16> to vector<1x8x8xbf16>
    "tpu.trace_start"() <{level = 10 : i32, message = "bqd,bkd->bqk"}> : () -> ()
    %cst_29 = arith.constant dense<0.000000e+00> : vector<1x8x8xf32>
    %55 = tpu.matmul %53, %54, %cst_29 {dimension_numbers = #tpu.dot_dimension_numbers<[2], [2], [1], [1], [0, 0, 0, 1, 1, 1], [0], [0]>} : vector<1x8x8xbf16>, vector<1x8x8xbf16>, vector<1x8x8xf32> -> vector<1x8x8xf32>
    "tpu.trace_stop"() : () -> ()
    %cst_30 = arith.constant dense<0xFF800000> : vector<1x8xf32>
    %56 = vector.multi_reduction <maximumf>, %55, %cst_30 [2] : vector<1x8x8xf32> to vector<1x8xf32>
    %57 = vector.shape_cast %56 : vector<1x8xf32> to vector<1x8x1xf32>
    %58 = vector.broadcast %57 : vector<1x8x1xf32> to vector<1x8x8xf32>
    %59 = arith.subf %55, %58 : vector<1x8x8xf32>
    %60 = math.exp %59 : vector<1x8x8xf32>
    %cst_31 = arith.constant dense<0.000000e+00> : vector<1x8xf32>
    %61 = vector.multi_reduction <add>, %60, %cst_31 [2] : vector<1x8x8xf32> to vector<1x8xf32>
    %62 = vector.shape_cast %61 : vector<1x8xf32> to vector<1x8x1xf32>
    %63 = tpu.reciprocal %62 {approx = true} : vector<1x8x1xf32> -> vector<1x8x1xf32>
    %64 = vector.broadcast %63 : vector<1x8x1xf32> to vector<1x8x8xf32>
    %65 = arith.mulf %60, %64 : vector<1x8x8xf32>
    %66 = arith.truncf %65 : vector<1x8x8xf32> to vector<1x8x8xbf16>
    %67 = vector.extract_strided_slice %52 {offsets = [0, 0, 0], sizes = [1, 8, 8], strides = [1, 1, 1]} : vector<1x8x32xbf16> to vector<1x8x8xbf16>
    "tpu.trace_start"() <{level = 10 : i32, message = "bqk,bkd->bqd"}> : () -> ()
    %cst_32 = arith.constant dense<0.000000e+00> : vector<1x8x8xf32>
    %68 = tpu.matmul %66, %67, %cst_32 {dimension_numbers = #tpu.dot_dimension_numbers<[2], [1], [1], [2], [0, 0, 0, 1, 1, 2], [0], [0]>} : vector<1x8x8xbf16>, vector<1x8x8xbf16>, vector<1x8x8xf32> -> vector<1x8x8xf32>
    "tpu.trace_stop"() : () -> ()
    %69 = arith.truncf %68 : vector<1x8x8xf32> to vector<1x8x8xbf16>
    %c0_33 = arith.constant 0 : index
    %c0_34 = arith.constant 0 : index
    %c0_35 = arith.constant 0 : index
    %70 = vector.load %arg20[%c0_33, %c0_34, %c0_35] : memref<1x8x32xbf16, #tpu.memory_space<vmem>>, vector<1x8x8xbf16>
    tpu.vector_store %arg20[%c0_33, %c0_34, %c0_35], %69 {strides = array<i32>} : memref<1x8x32xbf16, #tpu.memory_space<vmem>>, vector<1x8x8xbf16>,
    %71 = vector.extract_strided_slice %48 {offsets = [0, 0, 8], sizes = [1, 8, 8], strides = [1, 1, 1]} : vector<1x8x32xbf16> to vector<1x8x8xbf16>
    %72 = vector.extract_strided_slice %50 {offsets = [0, 0, 8], sizes = [1, 8, 8], strides = [1, 1, 1]} : vector<1x8x32xbf16> to vector<1x8x8xbf16>
    "tpu.trace_start"() <{level = 10 : i32, message = "bqd,bkd->bqk"}> : () -> ()
    %cst_36 = arith.constant dense<0.000000e+00> : vector<1x8x8xf32>
    %73 = tpu.matmul %71, %72, %cst_36 {dimension_numbers = #tpu.dot_dimension_numbers<[2], [2], [1], [1], [0, 0, 0, 1, 1, 1], [0], [0]>} : vector<1x8x8xbf16>, vector<1x8x8xbf16>, vector<1x8x8xf32> -> vector<1x8x8xf32>
    "tpu.trace_stop"() : () -> ()
    %cst_37 = arith.constant dense<0xFF800000> : vector<1x8xf32>
    %74 = vector.multi_reduction <maximumf>, %73, %cst_37 [2] : vector<1x8x8xf32> to vector<1x8xf32>
    %75 = vector.shape_cast %74 : vector<1x8xf32> to vector<1x8x1xf32>
    %76 = vector.broadcast %75 : vector<1x8x1xf32> to vector<1x8x8xf32>
    %77 = arith.subf %73, %76 : vector<1x8x8xf32>
    %78 = math.exp %77 : vector<1x8x8xf32>
    %cst_38 = arith.constant dense<0.000000e+00> : vector<1x8xf32>
    %79 = vector.multi_reduction <add>, %78, %cst_38 [2] : vector<1x8x8xf32> to vector<1x8xf32>
    %80 = vector.shape_cast %79 : vector<1x8xf32> to vector<1x8x1xf32>
    %81 = tpu.reciprocal %80 {approx = true} : vector<1x8x1xf32> -> vector<1x8x1xf32>
    %82 = vector.broadcast %81 : vector<1x8x1xf32> to vector<1x8x8xf32>
    %83 = arith.mulf %78, %82 : vector<1x8x8xf32>
    %84 = arith.truncf %83 : vector<1x8x8xf32> to vector<1x8x8xbf16>
    %85 = vector.extract_strided_slice %52 {offsets = [0, 0, 8], sizes = [1, 8, 8], strides = [1, 1, 1]} : vector<1x8x32xbf16> to vector<1x8x8xbf16>
    "tpu.trace_start"() <{level = 10 : i32, message = "bqk,bkd->bqd"}> : () -> ()
    %cst_39 = arith.constant dense<0.000000e+00> : vector<1x8x8xf32>
    %86 = tpu.matmul %84, %85, %cst_39 {dimension_numbers = #tpu.dot_dimension_numbers<[2], [1], [1], [2], [0, 0, 0, 1, 1, 2], [0], [0]>} : vector<1x8x8xbf16>, vector<1x8x8xbf16>, vector<1x8x8xf32> -> vector<1x8x8xf32>
    "tpu.trace_stop"() : () -> ()
    %87 = arith.truncf %86 : vector<1x8x8xf32> to vector<1x8x8xbf16>
    %c0_40 = arith.constant 0 : index
    %c0_41 = arith.constant 0 : index
    %c8 = arith.constant 8 : index
    %88 = vector.load %arg20[%c0_40, %c0_41, %c8] : memref<1x8x32xbf16, #tpu.memory_space<vmem>>, vector<1x8x8xbf16>
    tpu.vector_store %arg20[%c0_40, %c0_41, %c8], %87 {strides = array<i32>} : memref<1x8x32xbf16, #tpu.memory_space<vmem>>, vector<1x8x8xbf16>,
    %89 = vector.extract_strided_slice %48 {offsets = [0, 0, 16], sizes = [1, 8, 8], strides = [1, 1, 1]} : vector<1x8x32xbf16> to vector<1x8x8xbf16>
    %90 = vector.extract_strided_slice %50 {offsets = [0, 0, 16], sizes = [1, 8, 8], strides = [1, 1, 1]} : vector<1x8x32xbf16> to vector<1x8x8xbf16>
    "tpu.trace_start"() <{level = 10 : i32, message = "bqd,bkd->bqk"}> : () -> ()
    %cst_42 = arith.constant dense<0.000000e+00> : vector<1x8x8xf32>
    %91 = tpu.matmul %89, %90, %cst_42 {dimension_numbers = #tpu.dot_dimension_numbers<[2], [2], [1], [1], [0, 0, 0, 1, 1, 1], [0], [0]>} : vector<1x8x8xbf16>, vector<1x8x8xbf16>, vector<1x8x8xf32> -> vector<1x8x8xf32>
    "tpu.trace_stop"() : () -> ()
    %cst_43 = arith.constant dense<0xFF800000> : vector<1x8xf32>
    %92 = vector.multi_reduction <maximumf>, %91, %cst_43 [2] : vector<1x8x8xf32> to vector<1x8xf32>
    %93 = vector.shape_cast %92 : vector<1x8xf32> to vector<1x8x1xf32>
    %94 = vector.broadcast %93 : vector<1x8x1xf32> to vector<1x8x8xf32>
    %95 = arith.subf %91, %94 : vector<1x8x8xf32>
    %96 = math.exp %95 : vector<1x8x8xf32>
    %cst_44 = arith.constant dense<0.000000e+00> : vector<1x8xf32>
    %97 = vector.multi_reduction <add>, %96, %cst_44 [2] : vector<1x8x8xf32> to vector<1x8xf32>
    %98 = vector.shape_cast %97 : vector<1x8xf32> to vector<1x8x1xf32>
    %99 = tpu.reciprocal %98 {approx = true} : vector<1x8x1xf32> -> vector<1x8x1xf32>
    %100 = vector.broadcast %99 : vector<1x8x1xf32> to vector<1x8x8xf32>
    %101 = arith.mulf %96, %100 : vector<1x8x8xf32>
    %102 = arith.truncf %101 : vector<1x8x8xf32> to vector<1x8x8xbf16>
    %103 = vector.extract_strided_slice %52 {offsets = [0, 0, 16], sizes = [1, 8, 8], strides = [1, 1, 1]} : vector<1x8x32xbf16> to vector<1x8x8xbf16>
    "tpu.trace_start"() <{level = 10 : i32, message = "bqk,bkd->bqd"}> : () -> ()
    %cst_45 = arith.constant dense<0.000000e+00> : vector<1x8x8xf32>
    %104 = tpu.matmul %102, %103, %cst_45 {dimension_numbers = #tpu.dot_dimension_numbers<[2], [1], [1], [2], [0, 0, 0, 1, 1, 2], [0], [0]>} : vector<1x8x8xbf16>, vector<1x8x8xbf16>, vector<1x8x8xf32> -> vector<1x8x8xf32>
    "tpu.trace_stop"() : () -> ()
    %105 = arith.truncf %104 : vector<1x8x8xf32> to vector<1x8x8xbf16>
    %c0_46 = arith.constant 0 : index
    %c0_47 = arith.constant 0 : index
    %c16 = arith.constant 16 : index
    %106 = vector.load %arg20[%c0_46, %c0_47, %c16] : memref<1x8x32xbf16, #tpu.memory_space<vmem>>, vector<1x8x8xbf16>
    tpu.vector_store %arg20[%c0_46, %c0_47, %c16], %105 {strides = array<i32>} : memref<1x8x32xbf16, #tpu.memory_space<vmem>>, vector<1x8x8xbf16>,
    %107 = vector.extract_strided_slice %48 {offsets = [0, 0, 24], sizes = [1, 8, 8], strides = [1, 1, 1]} : vector<1x8x32xbf16> to vector<1x8x8xbf16>
    %108 = vector.extract_strided_slice %50 {offsets = [0, 0, 24], sizes = [1, 8, 8], strides = [1, 1, 1]} : vector<1x8x32xbf16> to vector<1x8x8xbf16>
    "tpu.trace_start"() <{level = 10 : i32, message = "bqd,bkd->bqk"}> : () -> ()
    %cst_48 = arith.constant dense<0.000000e+00> : vector<1x8x8xf32>
    %109 = tpu.matmul %107, %108, %cst_48 {dimension_numbers = #tpu.dot_dimension_numbers<[2], [2], [1], [1], [0, 0, 0, 1, 1, 1], [0], [0]>} : vector<1x8x8xbf16>, vector<1x8x8xbf16>, vector<1x8x8xf32> -> vector<1x8x8xf32>
    "tpu.trace_stop"() : () -> ()
    %cst_49 = arith.constant dense<0xFF800000> : vector<1x8xf32>
    %110 = vector.multi_reduction <maximumf>, %109, %cst_49 [2] : vector<1x8x8xf32> to vector<1x8xf32>
    %111 = vector.shape_cast %110 : vector<1x8xf32> to vector<1x8x1xf32>
    %112 = vector.broadcast %111 : vector<1x8x1xf32> to vector<1x8x8xf32>
    %113 = arith.subf %109, %112 : vector<1x8x8xf32>
    %114 = math.exp %113 : vector<1x8x8xf32>
    %cst_50 = arith.constant dense<0.000000e+00> : vector<1x8xf32>
    %115 = vector.multi_reduction <add>, %114, %cst_50 [2] : vector<1x8x8xf32> to vector<1x8xf32>
    %116 = vector.shape_cast %115 : vector<1x8xf32> to vector<1x8x1xf32>
    %117 = tpu.reciprocal %116 {approx = true} : vector<1x8x1xf32> -> vector<1x8x1xf32>
    %118 = vector.broadcast %117 : vector<1x8x1xf32> to vector<1x8x8xf32>
    %119 = arith.mulf %114, %118 : vector<1x8x8xf32>
    %120 = arith.truncf %119 : vector<1x8x8xf32> to vector<1x8x8xbf16>
    %121 = vector.extract_strided_slice %52 {offsets = [0, 0, 24], sizes = [1, 8, 8], strides = [1, 1, 1]} : vector<1x8x32xbf16> to vector<1x8x8xbf16>
    "tpu.trace_start"() <{level = 10 : i32, message = "bqk,bkd->bqd"}> : () -> ()
    %cst_51 = arith.constant dense<0.000000e+00> : vector<1x8x8xf32>
    %122 = tpu.matmul %120, %121, %cst_51 {dimension_numbers = #tpu.dot_dimension_numbers<[2], [1], [1], [2], [0, 0, 0, 1, 1, 2], [0], [0]>} : vector<1x8x8xbf16>, vector<1x8x8xbf16>, vector<1x8x8xf32> -> vector<1x8x8xf32>
    "tpu.trace_stop"() : () -> ()
    %123 = arith.truncf %122 : vector<1x8x8xf32> to vector<1x8x8xbf16>
    %c0_52 = arith.constant 0 : index
    %c0_53 = arith.constant 0 : index
    %c24 = arith.constant 24 : index
    %124 = vector.load %arg20[%c0_52, %c0_53, %c24] : memref<1x8x32xbf16, #tpu.memory_space<vmem>>, vector<1x8x8xbf16>
    tpu.vector_store %arg20[%c0_52, %c0_53, %c24], %123 {strides = array<i32>} : memref<1x8x32xbf16, #tpu.memory_space<vmem>>, vector<1x8x8xbf16>,
    %c0_54 = arith.constant 0 : index
    %c0_55 = arith.constant 0 : index
    %c0_56 = arith.constant 0 : index
    %125 = vector.load %arg20[%c0_54, %c0_55, %c0_56] : memref<1x8x32xbf16, #tpu.memory_space<vmem>>, vector<1x8x32xbf16>
    %126 = vector.shape_cast %125 : vector<1x8x32xbf16> to vector<8x32xbf16>
    %c0_57 = arith.constant 0 : index
    %c0_58 = arith.constant 0 : index
    %127 = vector.load %arg11[%c0_57, %c0_58] : memref<32x32xbf16, #tpu.memory_space<vmem>>, vector<32x32xbf16>
    %cst_59 = arith.constant dense<0.000000e+00> : vector<8x32xf32>
    %128 = tpu.matmul %126, %127, %cst_59 {dimension_numbers = #tpu.dot_dimension_numbers<[1], [0], [0], [1], [0, 0, 1, 1], [], []>} : vector<8x32xbf16>, vector<32x32xbf16>, vector<8x32xf32> -> vector<8x32xf32>
    %c0_60 = arith.constant 0 : index
    %c0_61 = arith.constant 0 : index
    %129 = vector.load %arg12[%c0_60, %c0_61] : memref<1x32xf32, #tpu.memory_space<vmem>>, vector<1x32xf32>
    %130 = vector.broadcast %129 : vector<1x32xf32> to vector<8x32xf32>
    %131 = arith.addf %128, %130 : vector<8x32xf32>
    %132 = arith.addf %131, %1 : vector<8x32xf32>
    %c0_62 = arith.constant 0 : index
    %c0_63 = arith.constant 0 : index
    %133 = vector.load %arg13[%c0_62, %c0_63] : memref<1x32xf32, #tpu.memory_space<vmem>>, vector<1x32xf32>
    %c0_64 = arith.constant 0 : index
    %c0_65 = arith.constant 0 : index
    %134 = vector.load %arg14[%c0_64, %c0_65] : memref<1x32xf32, #tpu.memory_space<vmem>>, vector<1x32xf32>
    %cst_66 = arith.constant dense<0.000000e+00> : vector<8xf32>
    %135 = vector.multi_reduction <add>, %132, %cst_66 [1] : vector<8x32xf32> to vector<8xf32>
    %136 = vector.shape_cast %135 : vector<8xf32> to vector<8x1xf32>
    %cst_67 = arith.constant 3.200000e+01 : f32
    %137 = vector.broadcast %cst_67 : f32 to vector<8x1xf32>
    %138 = arith.divf %136, %137 : vector<8x1xf32>
    %139 = vector.broadcast %138 : vector<8x1xf32> to vector<8x32xf32>
    %140 = arith.subf %132, %139 : vector<8x32xf32>
    %141 = arith.mulf %140, %140 : vector<8x32xf32>
    %cst_68 = arith.constant dense<0.000000e+00> : vector<8xf32>
    %142 = vector.multi_reduction <add>, %141, %cst_68 [1] : vector<8x32xf32> to vector<8xf32>
    %143 = vector.shape_cast %142 : vector<8xf32> to vector<8x1xf32>
    %cst_69 = arith.constant 3.200000e+01 : f32
    %144 = vector.broadcast %cst_69 : f32 to vector<8x1xf32>
    %145 = arith.divf %143, %144 : vector<8x1xf32>
    %146 = vector.broadcast %138 : vector<8x1xf32> to vector<8x32xf32>
    %147 = arith.subf %132, %146 : vector<8x32xf32>
    %cst_70 = arith.constant 9.99999974E-6 : f32
    %148 = vector.broadcast %cst_70 : f32 to vector<8x1xf32>
    %149 = arith.addf %145, %148 : vector<8x1xf32>
    %150 = math.rsqrt %149 : vector<8x1xf32>
    %151 = vector.broadcast %150 : vector<8x1xf32> to vector<8x32xf32>
    %152 = arith.mulf %147, %151 : vector<8x32xf32>
    %153 = vector.broadcast %133 : vector<1x32xf32> to vector<8x32xf32>
    %154 = arith.mulf %152, %153 : vector<8x32xf32>
    %155 = vector.broadcast %134 : vector<1x32xf32> to vector<8x32xf32>
    %156 = arith.addf %154, %155 : vector<8x32xf32>
    %157 = arith.truncf %156 : vector<8x32xf32> to vector<8x32xbf16>
    %cst_71 = arith.constant 0.000000e+00 : f32
    %158 = vector.broadcast %cst_71 : f32 to vector<8x32xf32>
    %c0_72 = arith.constant 0 : index
    %c0_73 = arith.constant 0 : index
    %159 = vector.load %arg15[%c0_72, %c0_73] : memref<32x128xbf16, #tpu.memory_space<vmem>>, vector<32x128xbf16>
    %cst_74 = arith.constant dense<0.000000e+00> : vector<8x128xf32>
    %160 = tpu.matmul %157, %159, %cst_74 {dimension_numbers = #tpu.dot_dimension_numbers<[1], [0], [0], [1], [0, 0, 1, 1], [], []>} : vector<8x32xbf16>, vector<32x128xbf16>, vector<8x128xf32> -> vector<8x128xf32>
    %c0_75 = arith.constant 0 : index
    %c0_76 = arith.constant 0 : index
    %161 = vector.load %arg16[%c0_75, %c0_76] : memref<1x128xf32, #tpu.memory_space<vmem>>, vector<1x128xf32>
    %162 = vector.broadcast %161 : vector<1x128xf32> to vector<8x128xf32>
    %163 = arith.addf %160, %162 : vector<8x128xf32>
    %cst_77 = arith.constant 5.000000e-01 : f32
    %164 = vector.broadcast %cst_77 : f32 to vector<8x128xf32>
    %165 = arith.mulf %164, %163 : vector<8x128xf32>
    %cst_78 = arith.constant 0.707106769 : f32
    %166 = vector.broadcast %cst_78 : f32 to vector<8x128xf32>
    %167 = arith.mulf %163, %166 : vector<8x128xf32>
    %168 = math.erf %167 : vector<8x128xf32>
    %cst_79 = arith.constant 1.000000e+00 : f32
    %169 = vector.broadcast %cst_79 : f32 to vector<8x128xf32>
    %170 = arith.addf %169, %168 : vector<8x128xf32>
    %171 = arith.mulf %165, %170 : vector<8x128xf32>
    %172 = arith.truncf %171 : vector<8x128xf32> to vector<8x128xbf16>
    %c0_80 = arith.constant 0 : index
    %c0_81 = arith.constant 0 : index
    %173 = vector.load %arg17[%c0_80, %c0_81] : memref<128x32xbf16, #tpu.memory_space<vmem>>, vector<128x32xbf16>
    %cst_82 = arith.constant dense<0.000000e+00> : vector<8x32xf32>
    %174 = tpu.matmul %172, %173, %cst_82 {dimension_numbers = #tpu.dot_dimension_numbers<[1], [0], [0], [1], [0, 0, 1, 1], [], []>} : vector<8x128xbf16>, vector<128x32xbf16>, vector<8x32xf32> -> vector<8x32xf32>
    %175 = arith.addf %158, %174 : vector<8x32xf32>
    %c0_83 = arith.constant 0 : index
    %c0_84 = arith.constant 0 : index
    %176 = vector.load %arg18[%c0_83, %c0_84] : memref<1x32xf32, #tpu.memory_space<vmem>>, vector<1x32xf32>
    %177 = vector.broadcast %176 : vector<1x32xf32> to vector<8x32xf32>
    %178 = arith.addf %175, %177 : vector<8x32xf32>
    %179 = arith.addf %178, %132 : vector<8x32xf32>
    %180 = vector.shape_cast %179 : vector<8x32xf32> to vector<1x8x32xf32>
    %c0_85 = arith.constant 0 : index
    %c0_86 = arith.constant 0 : index
    %c0_87 = arith.constant 0 : index
    %181 = vector.load %arg19[%c0_85, %c0_86, %c0_87] : memref<1x8x32xf32, #tpu.memory_space<vmem>>, vector<1x8x32xf32>
    tpu.vector_store %arg19[%c0_85, %c0_86, %c0_87], %180 {strides = array<i32>} : memref<1x8x32xf32, #tpu.memory_space<vmem>>, vector<1x8x32xf32>,
    return
  }
  func.func @transform_0(%arg0: i32) -> (i32, i32, i32) {
    %c0_i32 = arith.constant 0 : i32
    %c0_i32_0 = arith.constant 0 : i32
    %c0_i32_1 = arith.constant 0 : i32
    return %arg0, %c0_i32, %c0_i32_0 : i32, i32, i32
  }
  func.func @transform_1(%arg0: i32) -> (i32, i32, i32) {
    %c0_i32 = arith.constant 0 : i32
    %c0_i32_0 = arith.constant 0 : i32
    %c0_i32_1 = arith.constant 0 : i32
    return %arg0, %c0_i32, %c0_i32_0 : i32, i32, i32
  }
  func.func @transform_2(%arg0: i32) -> (i32, i32) {
    %c0_i32 = arith.constant 0 : i32
    %c0_i32_0 = arith.constant 0 : i32
    %c0_i32_1 = arith.constant 0 : i32
    return %c0_i32, %c0_i32_0 : i32, i32
  }
  func.func @transform_3(%arg0: i32) -> (i32, i32) {
    %c0_i32 = arith.constant 0 : i32
    %c0_i32_0 = arith.constant 0 : i32
    %c0_i32_1 = arith.constant 0 : i32
    return %c0_i32, %c0_i32_0 : i32, i32
  }
  func.func @transform_4(%arg0: i32) -> (i32, i32) {
    %c0_i32 = arith.constant 0 : i32
    %c0_i32_0 = arith.constant 0 : i32
    %c0_i32_1 = arith.constant 0 : i32
    return %c0_i32, %c0_i32_0 : i32, i32
  }
  func.func @transform_5(%arg0: i32) -> (i32, i32) {
    %c0_i32 = arith.constant 0 : i32
    %c0_i32_0 = arith.constant 0 : i32
    %c0_i32_1 = arith.constant 0 : i32
    return %c0_i32, %c0_i32_0 : i32, i32
  }
  func.func @transform_6(%arg0: i32) -> (i32, i32) {
    %c0_i32 = arith.constant 0 : i32
    %c0_i32_0 = arith.constant 0 : i32
    %c0_i32_1 = arith.constant 0 : i32
    return %c0_i32, %c0_i32_0 : i32, i32
  }
  func.func @transform_7(%arg0: i32) -> (i32, i32) {
    %c0_i32 = arith.constant 0 : i32
    %c0_i32_0 = arith.constant 0 : i32
    %c0_i32_1 = arith.constant 0 : i32
    return %c0_i32, %c0_i32_0 : i32, i32
  }
  func.func @transform_8(%arg0: i32) -> (i32, i32) {
    %c0_i32 = arith.constant 0 : i32
    %c0_i32_0 = arith.constant 0 : i32
    %c0_i32_1 = arith.constant 0 : i32
    return %c0_i32, %c0_i32_0 : i32, i32
  }
  func.func @transform_9(%arg0: i32) -> (i32, i32) {
    %c0_i32 = arith.constant 0 : i32
    %c0_i32_0 = arith.constant 0 : i32
    %c0_i32_1 = arith.constant 0 : i32
    return %c0_i32, %c0_i32_0 : i32, i32
  }
  func.func @transform_10(%arg0: i32) -> (i32, i32) {
    %c0_i32 = arith.constant 0 : i32
    %c0_i32_0 = arith.constant 0 : i32
    %c0_i32_1 = arith.constant 0 : i32
    return %c0_i32, %c0_i32_0 : i32, i32
  }
  func.func @transform_11(%arg0: i32) -> (i32, i32) {
    %c0_i32 = arith.constant 0 : i32
    %c0_i32_0 = arith.constant 0 : i32
    %c0_i32_1 = arith.constant 0 : i32
    return %c0_i32, %c0_i32_0 : i32, i32
  }
  func.func @transform_12(%arg0: i32) -> (i32, i32) {
    %c0_i32 = arith.constant 0 : i32
    %c0_i32_0 = arith.constant 0 : i32
    %c0_i32_1 = arith.constant 0 : i32
    return %c0_i32, %c0_i32_0 : i32, i32
  }
  func.func @transform_13(%arg0: i32) -> (i32, i32) {
    %c0_i32 = arith.constant 0 : i32
    %c0_i32_0 = arith.constant 0 : i32
    %c0_i32_1 = arith.constant 0 : i32
    return %c0_i32, %c0_i32_0 : i32, i32
  }
  func.func @transform_14(%arg0: i32) -> (i32, i32) {
    %c0_i32 = arith.constant 0 : i32
    %c0_i32_0 = arith.constant 0 : i32
    %c0_i32_1 = arith.constant 0 : i32
    return %c0_i32, %c0_i32_0 : i32, i32
  }
  func.func @transform_15(%arg0: i32) -> (i32, i32) {
    %c0_i32 = arith.constant 0 : i32
    %c0_i32_0 = arith.constant 0 : i32
    %c0_i32_1 = arith.constant 0 : i32
    return %c0_i32, %c0_i32_0 : i32, i32
  }
  func.func @transform_16(%arg0: i32) -> (i32, i32) {
    %c0_i32 = arith.constant 0 : i32
    %c0_i32_0 = arith.constant 0 : i32
    %c0_i32_1 = arith.constant 0 : i32
    return %c0_i32, %c0_i32_0 : i32, i32
  }
  func.func @transform_17(%arg0: i32) -> (i32, i32) {
    %c0_i32 = arith.constant 0 : i32
    %c0_i32_0 = arith.constant 0 : i32
    %c0_i32_1 = arith.constant 0 : i32
    return %c0_i32, %c0_i32_0 : i32, i32
  }
  func.func @transform_18(%arg0: i32) -> (i32, i32, i32) {
    %c0_i32 = arith.constant 0 : i32
    %c0_i32_0 = arith.constant 0 : i32
    %c0_i32_1 = arith.constant 0 : i32
    return %arg0, %c0_i32, %c0_i32_0 : i32, i32, i32
  }
}

</mosaic_0001>

<llo_original>
// kernel: tpu_custom_call.1
$region0: #{tpu_custom_call.1}
  #allocation0 [shape = 'u32[]', space=smem, size = 0x4, offset = 0x4, fixed_abs, tag = 'smem constant byte address 0x4 - core index']
  #allocation1 [shape = 'u32[144,128]{1,0:T(1,128)}', space=vmem, size = 0x12000, scoped, tag = 'internal scratch']
  #allocation2 [shape = 'bf16[1,8,32]{2,1,0:T(8,128)(2,1)}', space=vmem, size = 0x800, scoped, tag = 'scratch operand']
  %s0 = inlined_call_operand.vmem [shape: f32[2,8,32], index: 0, kind: input, shape index: {}]
  %s1 = inlined_call_operand.vmem [shape: f32[2,8,16], index: 1, kind: input, shape index: {}]
  %s2 = inlined_call_operand.vmem [shape: f32[1,32], index: 2, kind: input, shape index: {}]
  %s3 = inlined_call_operand.vmem [shape: f32[1,32], index: 3, kind: input, shape index: {}]
  %s4 = inlined_call_operand.vmem [shape: bf16[32,32], index: 4, kind: input, shape index: {}]
  %s5 = inlined_call_operand.vmem [shape: f32[1,32], index: 5, kind: input, shape index: {}]
  %s6 = inlined_call_operand.vmem [shape: bf16[16,32], index: 6, kind: input, shape index: {}]
  %s7 = inlined_call_operand.vmem [shape: f32[1,32], index: 7, kind: input, shape index: {}]
  %s8 = inlined_call_operand.hbm [shape: bf16[16,32], index: 8, kind: input, shape index: {}]
  %s9 = inlined_call_operand.vmem [shape: f32[1,32], index: 9, kind: input, shape index: {}]
  %s10 = inlined_call_operand.vmem [shape: bf16[32,32], index: 10, kind: input, shape index: {}]
  %s11 = inlined_call_operand.vmem [shape: f32[1,32], index: 11, kind: input, shape index: {}]
  %s12 = inlined_call_operand.vmem [shape: f32[1,32], index: 12, kind: input, shape index: {}]
  %s13 = inlined_call_operand.vmem [shape: f32[1,32], index: 13, kind: input, shape index: {}]
  %s14 = inlined_call_operand.vmem [shape: bf16[32,128], index: 14, kind: input, shape index: {}]
  %s15 = inlined_call_operand.vmem [shape: f32[1,128], index: 15, kind: input, shape index: {}]
  %s16 = inlined_call_operand.vmem [shape: bf16[128,32], index: 16, kind: input, shape index: {}]
  %s17 = inlined_call_operand.vmem [shape: f32[1,32], index: 17, kind: input, shape index: {}]
  %s18 = inlined_call_operand.hbm [shape: f32[2,8,32], index: 18, kind: output, shape index: {}]
  %s19 = sld [smem:[#allocation0]]
  $region109: #{tpu_custom_call.1} parent=0
    _
  %s21 = ssub.s32 1, %s19
  %s22 = scalar_select 0, %s21, %s19
  $region1: #{tpu_custom_call.1} parent=0
    #allocation3 [shape = 'u8[4096]{0}', space=vmem, size = 0x1000, scoped, tag = 'input window, operand 8, single buffered']
    #allocation4 [shape = 's32[2]{0}', space=sflag, size = 0x8, scoped, tag = 'scoped memory for tpu_custom_call.1']
    #allocation5 [shape = 's32[2]{0}', space=sflag, size = 0x8, scoped, tag = 'scoped memory for tpu_custom_call.1']
    #allocation6 [shape = 'u8[8192]{0}', space=vmem, size = 0x2000, scoped, tag = 'output window, operand 0']
    %23 = vsyncpa [#allocation4], 0
    %24 = vsyncpa [#allocation5], 0
    %s25 = scalar_lea.sflag [#allocation5], 1
    %26 = vsyncpa %s25, 0
    loop: start=0, step=1, limit=4
    $region2: #{tpu_custom_call.1} parent=1 // loop_pre_header
      _
    $region3: #{tpu_custom_call.1} parent=1 // loop_header
      %s28 = sphi 0, %s32
      %p29 = scmp.ge.s32.totalorder %s28, 4
      %s38 = sphi 0, %s40
      %s41 = sphi 0, %s38
      %s42 = sphi 0, %s41
      %s58 = sphi 0, %s42
      %s64 = sphi 0, %s66
      %s67 = sphi 0, %s64
      %s68 = sphi 0, %s67
      %s84 = sphi 0, %s68
      %s88 = sphi 0, %s88
      %s90 = sphi 0, %s88
      %s91 = sphi 0, %s90
      %s105 = sphi 0, %s91
      %s109 = sphi 0, %s109
      %s111 = sphi 0, %s109
      %s112 = sphi 0, %s111
      %s126 = sphi 0, %s112
      %s130 = sphi 0, %s130
      %s132 = sphi 0, %s130
      %s133 = sphi 0, %s132
      %s147 = sphi 0, %s133
      %s151 = sphi 0, %s151
      %s153 = sphi 0, %s151
      %s154 = sphi 0, %s153
      %s168 = sphi 0, %s154
      %s172 = sphi 0, %s172
      %s174 = sphi 0, %s172
      %s175 = sphi 0, %s174
      %s189 = sphi 0, %s175
      %s193 = sphi 0, %s193
      %s195 = sphi 0, %s193
      %s196 = sphi 0, %s195
      %s210 = sphi 0, %s196
      %s214 = sphi 0, %s214
      %s216 = sphi 0, %s214
      %s217 = sphi 0, %s216
      %s231 = sphi 0, %s217
      %s235 = sphi 0, %s235
      %s237 = sphi 0, %s235
      %s238 = sphi 0, %s237
      %s252 = sphi 0, %s238
      %s256 = sphi 0, %s256
      %s258 = sphi 0, %s256
      %s259 = sphi 0, %s258
      %s273 = sphi 0, %s259
      %s277 = sphi 0, %s277
      %s279 = sphi 0, %s277
      %s280 = sphi 0, %s279
      %s294 = sphi 0, %s280
      %s298 = sphi 0, %s298
      %s300 = sphi 0, %s298
      %s301 = sphi 0, %s300
      %s315 = sphi 0, %s301
      %s319 = sphi 0, %s319
      %s321 = sphi 0, %s319
      %s322 = sphi 0, %s321
      %s336 = sphi 0, %s322
      %s340 = sphi 0, %s340
      %s342 = sphi 0, %s340
      %s343 = sphi 0, %s342
      %s357 = sphi 0, %s343
      %s361 = sphi 0, %s361
      %s363 = sphi 0, %s361
      %s364 = sphi 0, %s363
      %s378 = sphi 0, %s364
      %s382 = sphi 0, %s382
      %s384 = sphi 0, %s382
      %s385 = sphi 0, %s384
      %s399 = sphi 0, %s385
      %s403 = sphi 0, %s403
      %s405 = sphi 0, %s403
      %s406 = sphi 0, %s405
      %s420 = sphi 0, %s406
      %s426 = sphi 0, %s428
      %s429 = sphi 0, %s426
      %s430 = sphi 0, %s429
      %s446 = sphi 0, %s430
    $region4: #{tpu_custom_call.1} parent=1 // loop_header_branch
      %31 = sbr.rel (%p29) target = $region8
    $region5: #{tpu_custom_call.1} parent=1 // loop_body
      %s33 = ssub.s32 %s28, 1
      %s34 = ssub.s32 %s28, 2
      %s35 = sadd.s32 %s28, 1
      %s36 = ssub.s32 %s28, %s35
      %p37 = scmp.eq.s32.totalorder %s36, 0
      %s39 = sadd.s32 %s38, 1
      %s40 = scalar_select %p37, %s38, %s39
      %p43 = pneg %p37
      %p44 = scmp.eq.s32.totalorder %s28, 1
      %p45 = por %p43, %p44
      %p46 = scmp.ne.s32.totalorder %s38, %s41
      %p47 = scmp.eq.s32.totalorder %s28, 0
      %p48 = por %p46, %p47
      %p49 = scmp.ne.s32.totalorder %s38, %s41
      %p50 = scmp.eq.s32.totalorder %s33, 1
      %p51 = por %p49, %p50
      %p52 = scmp.ne.s32.totalorder %s41, %s42
      %p53 = scmp.eq.s32.totalorder %s33, 0
      %p54 = por %p52, %p53
      %p55 = scmp.ne.s32.totalorder %s41, %s42
      %p56 = scmp.eq.s32.totalorder %s34, 1
      %p57 = por %p55, %p56
      %p59 = scmp.ne.s32.totalorder %s42, %s58
      %p60 = scmp.eq.s32.totalorder %s34, 0
      %p61 = por %p59, %p60
      %s62 = ssub.s32 %s28, %s35
      %p63 = scmp.eq.s32.totalorder %s62, 0
      %s65 = sadd.s32 %s64, 1
      %s66 = scalar_select %p63, %s64, %s65
      %p69 = pneg %p63
      %p70 = scmp.eq.s32.totalorder %s28, 1
      %p71 = por %p69, %p70
      %p72 = scmp.ne.s32.totalorder %s64, %s67
      %p73 = scmp.eq.s32.totalorder %s28, 0
      %p74 = por %p72, %p73
      %p75 = scmp.ne.s32.totalorder %s64, %s67
      %p76 = scmp.eq.s32.totalorder %s33, 1
      %p77 = por %p75, %p76
      %p78 = scmp.ne.s32.totalorder %s67, %s68
      %p79 = scmp.eq.s32.totalorder %s33, 0
      %p80 = por %p78, %p79
      %p81 = scmp.ne.s32.totalorder %s67, %s68
      %p82 = scmp.eq.s32.totalorder %s34, 1
      %p83 = por %p81, %p82
      %p85 = scmp.ne.s32.totalorder %s68, %s84
      %p86 = scmp.eq.s32.totalorder %s34, 0
      %p87 = por %p85, %p86
      %s89 = sadd.s32 %s88, 1
      %p92 = scmp.eq.s32.totalorder %s28, 1
      %p93 = scmp.ne.s32.totalorder %s88, %s90
      %p94 = scmp.eq.s32.totalorder %s28, 0
      %p95 = por %p93, %p94
      %p96 = scmp.ne.s32.totalorder %s88, %s90
      %p97 = scmp.eq.s32.totalorder %s33, 1
      %p98 = por %p96, %p97
      %p99 = scmp.ne.s32.totalorder %s90, %s91
      %p100 = scmp.eq.s32.totalorder %s33, 0
      %p101 = por %p99, %p100
      %p102 = scmp.ne.s32.totalorder %s90, %s91
      %p103 = scmp.eq.s32.totalorder %s34, 1
      %p104 = por %p102, %p103
      %p106 = scmp.ne.s32.totalorder %s91, %s105
      %p107 = scmp.eq.s32.totalorder %s34, 0
      %p108 = por %p106, %p107
      %s110 = sadd.s32 %s109, 1
      %p113 = scmp.eq.s32.totalorder %s28, 1
      %p114 = scmp.ne.s32.totalorder %s109, %s111
      %p115 = scmp.eq.s32.totalorder %s28, 0
      %p116 = por %p114, %p115
      %p117 = scmp.ne.s32.totalorder %s109, %s111
      %p118 = scmp.eq.s32.totalorder %s33, 1
      %p119 = por %p117, %p118
      %p120 = scmp.ne.s32.totalorder %s111, %s112
      %p121 = scmp.eq.s32.totalorder %s33, 0
      %p122 = por %p120, %p121
      %p123 = scmp.ne.s32.totalorder %s111, %s112
      %p124 = scmp.eq.s32.totalorder %s34, 1
      %p125 = por %p123, %p124
      %p127 = scmp.ne.s32.totalorder %s112, %s126
      %p128 = scmp.eq.s32.totalorder %s34, 0
      %p129 = por %p127, %p128
      %s131 = sadd.s32 %s130, 1
      %p134 = scmp.eq.s32.totalorder %s28, 1
      %p135 = scmp.ne.s32.totalorder %s130, %s132
      %p136 = scmp.eq.s32.totalorder %s28, 0
      %p137 = por %p135, %p136
      %p138 = scmp.ne.s32.totalorder %s130, %s132
      %p139 = scmp.eq.s32.totalorder %s33, 1
      %p140 = por %p138, %p139
      %p141 = scmp.ne.s32.totalorder %s132, %s133
      %p142 = scmp.eq.s32.totalorder %s33, 0
      %p143 = por %p141, %p142
      %p144 = scmp.ne.s32.totalorder %s132, %s133
      %p145 = scmp.eq.s32.totalorder %s34, 1
      %p146 = por %p144, %p145
      %p148 = scmp.ne.s32.totalorder %s133, %s147
      %p149 = scmp.eq.s32.totalorder %s34, 0
      %p150 = por %p148, %p149
      %s152 = sadd.s32 %s151, 1
      %p155 = scmp.eq.s32.totalorder %s28, 1
      %p156 = scmp.ne.s32.totalorder %s151, %s153
      %p157 = scmp.eq.s32.totalorder %s28, 0
      %p158 = por %p156, %p157
      %p159 = scmp.ne.s32.totalorder %s151, %s153
      %p160 = scmp.eq.s32.totalorder %s33, 1
      %p161 = por %p159, %p160
      %p162 = scmp.ne.s32.totalorder %s153, %s154
      %p163 = scmp.eq.s32.totalorder %s33, 0
      %p164 = por %p162, %p163
      %p165 = scmp.ne.s32.totalorder %s153, %s154
      %p166 = scmp.eq.s32.totalorder %s34, 1
      %p167 = por %p165, %p166
      %p169 = scmp.ne.s32.totalorder %s154, %s168
      %p170 = scmp.eq.s32.totalorder %s34, 0
      %p171 = por %p169, %p170
      %s173 = sadd.s32 %s172, 1
      %p176 = scmp.eq.s32.totalorder %s28, 1
      %p177 = scmp.ne.s32.totalorder %s172, %s174
      %p178 = scmp.eq.s32.totalorder %s28, 0
      %p179 = por %p177, %p178
      %p180 = scmp.ne.s32.totalorder %s172, %s174
      %p181 = scmp.eq.s32.totalorder %s33, 1
      %p182 = por %p180, %p181
      %p183 = scmp.ne.s32.totalorder %s174, %s175
      %p184 = scmp.eq.s32.totalorder %s33, 0
      %p185 = por %p183, %p184
      %p186 = scmp.ne.s32.totalorder %s174, %s175
      %p187 = scmp.eq.s32.totalorder %s34, 1
      %p188 = por %p186, %p187
      %p190 = scmp.ne.s32.totalorder %s175, %s189
      %p191 = scmp.eq.s32.totalorder %s34, 0
      %p192 = por %p190, %p191
      %s194 = sadd.s32 %s193, 1
      %p197 = scmp.eq.s32.totalorder %s28, 1
      %p198 = scmp.ne.s32.totalorder %s193, %s195
      %p199 = scmp.eq.s32.totalorder %s28, 0
      %p200 = por %p198, %p199
      %p201 = scmp.ne.s32.totalorder %s193, %s195
      %p202 = scmp.eq.s32.totalorder %s33, 1
      %p203 = por %p201, %p202
      %p204 = scmp.ne.s32.totalorder %s195, %s196
      %p205 = scmp.eq.s32.totalorder %s33, 0
      %p206 = por %p204, %p205
      %p207 = scmp.ne.s32.totalorder %s195, %s196
      %p208 = scmp.eq.s32.totalorder %s34, 1
      %p209 = por %p207, %p208
      %p211 = scmp.ne.s32.totalorder %s196, %s210
      %p212 = scmp.eq.s32.totalorder %s34, 0
      %p213 = por %p211, %p212
      %s215 = sadd.s32 %s214, 1
      %p218 = scmp.eq.s32.totalorder %s28, 1
      %p219 = scmp.ne.s32.totalorder %s214, %s216
      %p220 = scmp.eq.s32.totalorder %s28, 0
      %p221 = por %p219, %p220
      %p222 = scmp.ne.s32.totalorder %s214, %s216
      %p223 = scmp.eq.s32.totalorder %s33, 1
      %p224 = por %p222, %p223
      %p225 = scmp.ne.s32.totalorder %s216, %s217
      %p226 = scmp.eq.s32.totalorder %s33, 0
      %p227 = por %p225, %p226
      %p228 = scmp.ne.s32.totalorder %s216, %s217
      %p229 = scmp.eq.s32.totalorder %s34, 1
      %p230 = por %p228, %p229
      %p232 = scmp.ne.s32.totalorder %s217, %s231
      %p233 = scmp.eq.s32.totalorder %s34, 0
      %p234 = por %p232, %p233
      %s236 = sadd.s32 %s235, 1
      %p239 = scmp.eq.s32.totalorder %s28, 1
      %p240 = scmp.ne.s32.totalorder %s235, %s237
      %p241 = scmp.eq.s32.totalorder %s28, 0
      %p242 = por %p240, %p241
      %p243 = scmp.ne.s32.totalorder %s235, %s237
      %p244 = scmp.eq.s32.totalorder %s33, 1
      %p245 = por %p243, %p244
      %p246 = scmp.ne.s32.totalorder %s237, %s238
      %p247 = scmp.eq.s32.totalorder %s33, 0
      %p248 = por %p246, %p247
      %p249 = scmp.ne.s32.totalorder %s237, %s238
      %p250 = scmp.eq.s32.totalorder %s34, 1
      %p251 = por %p249, %p250
      %p253 = scmp.ne.s32.totalorder %s238, %s252
      %p254 = scmp.eq.s32.totalorder %s34, 0
      %p255 = por %p253, %p254
      %s257 = sadd.s32 %s256, 1
      %p260 = scmp.eq.s32.totalorder %s28, 1
      %p261 = scmp.ne.s32.totalorder %s256, %s258
      %p262 = scmp.eq.s32.totalorder %s28, 0
      %p263 = por %p261, %p262
      %p264 = scmp.ne.s32.totalorder %s256, %s258
      %p265 = scmp.eq.s32.totalorder %s33, 1
      %p266 = por %p264, %p265
      %p267 = scmp.ne.s32.totalorder %s258, %s259
      %p268 = scmp.eq.s32.totalorder %s33, 0
      %p269 = por %p267, %p268
      %p270 = scmp.ne.s32.totalorder %s258, %s259
      %p271 = scmp.eq.s32.totalorder %s34, 1
      %p272 = por %p270, %p271
      %p274 = scmp.ne.s32.totalorder %s259, %s273
      %p275 = scmp.eq.s32.totalorder %s34, 0
      %p276 = por %p274, %p275
      %s278 = sadd.s32 %s277, 1
      %p281 = scmp.eq.s32.totalorder %s28, 1
      %p282 = scmp.ne.s32.totalorder %s277, %s279
      %p283 = scmp.eq.s32.totalorder %s28, 0
      %p284 = por %p282, %p283
      %p285 = scmp.ne.s32.totalorder %s277, %s279
      %p286 = scmp.eq.s32.totalorder %s33, 1
      %p287 = por %p285, %p286
      %p288 = scmp.ne.s32.totalorder %s279, %s280
      %p289 = scmp.eq.s32.totalorder %s33, 0
      %p290 = por %p288, %p289
      %p291 = scmp.ne.s32.totalorder %s279, %s280
      %p292 = scmp.eq.s32.totalorder %s34, 1
      %p293 = por %p291, %p292
      %p295 = scmp.ne.s32.totalorder %s280, %s294
      %p296 = scmp.eq.s32.totalorder %s34, 0
      %p297 = por %p295, %p296
      %s299 = sadd.s32 %s298, 1
      %p302 = scmp.eq.s32.totalorder %s28, 1
      %p303 = scmp.ne.s32.totalorder %s298, %s300
      %p304 = scmp.eq.s32.totalorder %s28, 0
      %p305 = por %p303, %p304
      %p306 = scmp.ne.s32.totalorder %s298, %s300
      %p307 = scmp.eq.s32.totalorder %s33, 1
      %p308 = por %p306, %p307
      %p309 = scmp.ne.s32.totalorder %s300, %s301
      %p310 = scmp.eq.s32.totalorder %s33, 0
      %p311 = por %p309, %p310
      %p312 = scmp.ne.s32.totalorder %s300, %s301
      %p313 = scmp.eq.s32.totalorder %s34, 1
      %p314 = por %p312, %p313
      %p316 = scmp.ne.s32.totalorder %s301, %s315
      %p317 = scmp.eq.s32.totalorder %s34, 0
      %p318 = por %p316, %p317
      %s320 = sadd.s32 %s319, 1
      %p323 = scmp.eq.s32.totalorder %s28, 1
      %p324 = scmp.ne.s32.totalorder %s319, %s321
      %p325 = scmp.eq.s32.totalorder %s28, 0
      %p326 = por %p324, %p325
      %p327 = scmp.ne.s32.totalorder %s319, %s321
      %p328 = scmp.eq.s32.totalorder %s33, 1
      %p329 = por %p327, %p328
      %p330 = scmp.ne.s32.totalorder %s321, %s322
      %p331 = scmp.eq.s32.totalorder %s33, 0
      %p332 = por %p330, %p331
      %p333 = scmp.ne.s32.totalorder %s321, %s322
      %p334 = scmp.eq.s32.totalorder %s34, 1
      %p335 = por %p333, %p334
      %p337 = scmp.ne.s32.totalorder %s322, %s336
      %p338 = scmp.eq.s32.totalorder %s34, 0
      %p339 = por %p337, %p338
      %s341 = sadd.s32 %s340, 1
      %p344 = scmp.eq.s32.totalorder %s28, 1
      %p345 = scmp.ne.s32.totalorder %s340, %s342
      %p346 = scmp.eq.s32.totalorder %s28, 0
      %p347 = por %p345, %p346
      %p348 = scmp.ne.s32.totalorder %s340, %s342
      %p349 = scmp.eq.s32.totalorder %s33, 1
      %p350 = por %p348, %p349
      %p351 = scmp.ne.s32.totalorder %s342, %s343
      %p352 = scmp.eq.s32.totalorder %s33, 0
      %p353 = por %p351, %p352
      %p354 = scmp.ne.s32.totalorder %s342, %s343
      %p355 = scmp.eq.s32.totalorder %s34, 1
      %p356 = por %p354, %p355
      %p358 = scmp.ne.s32.totalorder %s343, %s357
      %p359 = scmp.eq.s32.totalorder %s34, 0
      %p360 = por %p358, %p359
      %s362 = sadd.s32 %s361, 1
      %p365 = scmp.eq.s32.totalorder %s28, 1
      %p366 = scmp.ne.s32.totalorder %s361, %s363
      %p367 = scmp.eq.s32.totalorder %s28, 0
      %p368 = por %p366, %p367
      %p369 = scmp.ne.s32.totalorder %s361, %s363
      %p370 = scmp.eq.s32.totalorder %s33, 1
      %p371 = por %p369, %p370
      %p372 = scmp.ne.s32.totalorder %s363, %s364
      %p373 = scmp.eq.s32.totalorder %s33, 0
      %p374 = por %p372, %p373
      %p375 = scmp.ne.s32.totalorder %s363, %s364
      %p376 = scmp.eq.s32.totalorder %s34, 1
      %p377 = por %p375, %p376
      %p379 = scmp.ne.s32.totalorder %s364, %s378
      %p380 = scmp.eq.s32.totalorder %s34, 0
      %p381 = por %p379, %p380
      %s383 = sadd.s32 %s382, 1
      %p386 = scmp.eq.s32.totalorder %s28, 1
      %p387 = scmp.ne.s32.totalorder %s382, %s384
      %p388 = scmp.eq.s32.totalorder %s28, 0
      %p389 = por %p387, %p388
      %p390 = scmp.ne.s32.totalorder %s382, %s384
      %p391 = scmp.eq.s32.totalorder %s33, 1
      %p392 = por %p390, %p391
      %p393 = scmp.ne.s32.totalorder %s384, %s385
      %p394 = scmp.eq.s32.totalorder %s33, 0
      %p395 = por %p393, %p394
      %p396 = scmp.ne.s32.totalorder %s384, %s385
      %p397 = scmp.eq.s32.totalorder %s34, 1
      %p398 = por %p396, %p397
      %p400 = scmp.ne.s32.totalorder %s385, %s399
      %p401 = scmp.eq.s32.totalorder %s34, 0
      %p402 = por %p400, %p401
      %s404 = sadd.s32 %s403, 1
      %p407 = scmp.eq.s32.totalorder %s28, 1
      %p408 = scmp.ne.s32.totalorder %s403, %s405
      %p409 = scmp.eq.s32.totalorder %s28, 0
      %p410 = por %p408, %p409
      %p411 = scmp.ne.s32.totalorder %s403, %s405
      %p412 = scmp.eq.s32.totalorder %s33, 1
      %p413 = por %p411, %p412
      %p414 = scmp.ne.s32.totalorder %s405, %s406
      %p415 = scmp.eq.s32.totalorder %s33, 0
      %p416 = por %p414, %p415
      %p417 = scmp.ne.s32.totalorder %s405, %s406
      %p418 = scmp.eq.s32.totalorder %s34, 1
      %p419 = por %p417, %p418
      %p421 = scmp.ne.s32.totalorder %s406, %s420
      %p422 = scmp.eq.s32.totalorder %s34, 0
      %p423 = por %p421, %p422
      %s424 = ssub.s32 %s28, %s35
      %p425 = scmp.eq.s32.totalorder %s424, 0
      %s427 = sadd.s32 %s426, 1
      %s428 = scalar_select %p425, %s426, %s427
      %p431 = pneg %p425
      %p432 = scmp.eq.s32.totalorder %s28, 1
      %p433 = por %p431, %p432
      %p434 = scmp.ne.s32.totalorder %s426, %s429
      %p435 = scmp.eq.s32.totalorder %s28, 0
      %p436 = por %p434, %p435
      %p437 = scmp.ne.s32.totalorder %s426, %s429
      %p438 = scmp.eq.s32.totalorder %s33, 1
      %p439 = por %p437, %p438
      %p440 = scmp.ne.s32.totalorder %s429, %s430
      %p441 = scmp.eq.s32.totalorder %s33, 0
      %p442 = por %p440, %p441
      %p443 = scmp.ne.s32.totalorder %s429, %s430
      %p444 = scmp.eq.s32.totalorder %s34, 1
      %p445 = por %p443, %p444
      %p447 = scmp.ne.s32.totalorder %s430, %s446
      %p448 = scmp.eq.s32.totalorder %s34, 0
      %p449 = por %p447, %p448
      %p450 = scmp.le.s32.totalorder 1, %s28
      %p451 = scmp.lt.s32.totalorder %s28, 3
      %p452 = pnand %p450, %p451
      %p453 = pneg %p452
      // Predicated region
      $region9: #{tpu_custom_call.1} parent=5 // pred_check
        _
      $region10: #{tpu_custom_call.1} parent=5 // pred_check_branch
        %455 = sbr.rel (%p452) target = $region12
      $region11: #{tpu_custom_call.1} parent=5 // pred_region
        %s456 = ssub.s32 %s28, 1
        // Predicated region
        $region13: #{tpu_custom_call.1} parent=11 // pred_check
          %p457 = pneg %p101
        $region14: #{tpu_custom_call.1} parent=11 // pred_check_branch
          %459 = sbr.rel (%p457) target = $region16
        $region15: #{tpu_custom_call.1} parent=11 // pred_region
          _
        $region16: #{tpu_custom_call.1} parent=11 // pred_fallthru
          _
        // Predicated region
        $region17: #{tpu_custom_call.1} parent=11 // pred_check
          %p460 = pneg %p122
        $region18: #{tpu_custom_call.1} parent=11 // pred_check_branch
          %462 = sbr.rel (%p460) target = $region20
        $region19: #{tpu_custom_call.1} parent=11 // pred_region
          _
        $region20: #{tpu_custom_call.1} parent=11 // pred_fallthru
          _
        // Predicated region
        $region21: #{tpu_custom_call.1} parent=11 // pred_check
          %p463 = pneg %p143
        $region22: #{tpu_custom_call.1} parent=11 // pred_check_branch
          %465 = sbr.rel (%p463) target = $region24
        $region23: #{tpu_custom_call.1} parent=11 // pred_region
          _
        $region24: #{tpu_custom_call.1} parent=11 // pred_fallthru
          _
        // Predicated region
        $region25: #{tpu_custom_call.1} parent=11 // pred_check
          %p466 = pneg %p164
        $region26: #{tpu_custom_call.1} parent=11 // pred_check_branch
          %468 = sbr.rel (%p466) target = $region28
        $region27: #{tpu_custom_call.1} parent=11 // pred_region
          _
        $region28: #{tpu_custom_call.1} parent=11 // pred_fallthru
          _
        // Predicated region
        $region29: #{tpu_custom_call.1} parent=11 // pred_check
          %p469 = pneg %p185
        $region30: #{tpu_custom_call.1} parent=11 // pred_check_branch
          %471 = sbr.rel (%p469) target = $region32
        $region31: #{tpu_custom_call.1} parent=11 // pred_region
          _
        $region32: #{tpu_custom_call.1} parent=11 // pred_fallthru
          _
        // Predicated region
        $region33: #{tpu_custom_call.1} parent=11 // pred_check
          %p472 = pneg %p206
        $region34: #{tpu_custom_call.1} parent=11 // pred_check_branch
          %474 = sbr.rel (%p472) target = $region36
        $region35: #{tpu_custom_call.1} parent=11 // pred_region
          _
        $region36: #{tpu_custom_call.1} parent=11 // pred_fallthru
          _
        // Predicated region
        $region37: #{tpu_custom_call.1} parent=11 // pred_check
          %p475 = pneg %p227
        $region38: #{tpu_custom_call.1} parent=11 // pred_check_branch
          %477 = sbr.rel (%p475) target = $region40
        $region39: #{tpu_custom_call.1} parent=11 // pred_region
          %s479 = ssub.s32 128, 128
          %480 = vsyncadd [#allocation4], %s479
          %s481 = sshll.u32 [#allocation3], 4
          %s482 = int_to_ptr.vmem [resolvable:$true] %s481
          %487 = dma.hbm_to_vmem [thread:$0]  %s8, 128, %s482, [#allocation4], 64, 64, 4
        $region40: #{tpu_custom_call.1} parent=11 // pred_fallthru
          _
        // Predicated region
        $region41: #{tpu_custom_call.1} parent=11 // pred_check
          %p488 = pneg %p248
        $region42: #{tpu_custom_call.1} parent=11 // pred_check_branch
          %490 = sbr.rel (%p488) target = $region44
        $region43: #{tpu_custom_call.1} parent=11 // pred_region
          _
        $region44: #{tpu_custom_call.1} parent=11 // pred_fallthru
          _
        // Predicated region
        $region45: #{tpu_custom_call.1} parent=11 // pred_check
          %p491 = pneg %p269
        $region46: #{tpu_custom_call.1} parent=11 // pred_check_branch
          %493 = sbr.rel (%p491) target = $region48
        $region47: #{tpu_custom_call.1} parent=11 // pred_region
          _
        $region48: #{tpu_custom_call.1} parent=11 // pred_fallthru
          _
        // Predicated region
        $region49: #{tpu_custom_call.1} parent=11 // pred_check
          %p494 = pneg %p290
        $region50: #{tpu_custom_call.1} parent=11 // pred_check_branch
          %496 = sbr.rel (%p494) target = $region52
        $region51: #{tpu_custom_call.1} parent=11 // pred_region
          _
        $region52: #{tpu_custom_call.1} parent=11 // pred_fallthru
          _
        // Predicated region
        $region53: #{tpu_custom_call.1} parent=11 // pred_check
          %p497 = pneg %p311
        $region54: #{tpu_custom_call.1} parent=11 // pred_check_branch
          %499 = sbr.rel (%p497) target = $region56
        $region55: #{tpu_custom_call.1} parent=11 // pred_region
          _
        $region56: #{tpu_custom_call.1} parent=11 // pred_fallthru
          _
        // Predicated region
        $region57: #{tpu_custom_call.1} parent=11 // pred_check
          %p500 = pneg %p332
        $region58: #{tpu_custom_call.1} parent=11 // pred_check_branch
          %502 = sbr.rel (%p500) target = $region60
        $region59: #{tpu_custom_call.1} parent=11 // pred_region
          _
        $region60: #{tpu_custom_call.1} parent=11 // pred_fallthru
          _
        // Predicated region
        $region61: #{tpu_custom_call.1} parent=11 // pred_check
          %p503 = pneg %p353
        $region62: #{tpu_custom_call.1} parent=11 // pred_check_branch
          %505 = sbr.rel (%p503) target = $region64
        $region63: #{tpu_custom_call.1} parent=11 // pred_region
          _
        $region64: #{tpu_custom_call.1} parent=11 // pred_fallthru
          _
        // Predicated region
        $region65: #{tpu_custom_call.1} parent=11 // pred_check
          %p506 = pneg %p374
        $region66: #{tpu_custom_call.1} parent=11 // pred_check_branch
          %508 = sbr.rel (%p506) target = $region68
        $region67: #{tpu_custom_call.1} parent=11 // pred_region
          _
        $region68: #{tpu_custom_call.1} parent=11 // pred_fallthru
          _
        // Predicated region
        $region69: #{tpu_custom_call.1} parent=11 // pred_check
          %p509 = pneg %p395
        $region70: #{tpu_custom_call.1} parent=11 // pred_check_branch
          %511 = sbr.rel (%p509) target = $region72
        $region71: #{tpu_custom_call.1} parent=11 // pred_region
          _
        $region72: #{tpu_custom_call.1} parent=11 // pred_fallthru
          _
        // Predicated region
        $region73: #{tpu_custom_call.1} parent=11 // pred_check
          %p512 = pneg %p416
        $region74: #{tpu_custom_call.1} parent=11 // pred_check_branch
          %514 = sbr.rel (%p512) target = $region76
        $region75: #{tpu_custom_call.1} parent=11 // pred_region
          _
        $region76: #{tpu_custom_call.1} parent=11 // pred_fallthru
          _
      $region12: #{tpu_custom_call.1} parent=5 // pred_fallthru
        _
      %p515 = scmp.lt.s32.totalorder %s28, 2
      // Predicated region
      $region77: #{tpu_custom_call.1} parent=5 // pred_check
        %p516 = pneg %p515
      $region78: #{tpu_custom_call.1} parent=5 // pred_check_branch
        %518 = sbr.rel (%p516) target = $region80
      $region79: #{tpu_custom_call.1} parent=5 // pred_region
        // Predicated region
        $region81: #{tpu_custom_call.1} parent=79 // pred_check
          %p519 = pneg %p48
        $region82: #{tpu_custom_call.1} parent=79 // pred_check_branch
          %521 = sbr.rel (%p519) target = $region84
        $region83: #{tpu_custom_call.1} parent=79 // pred_region
          %p522 = scmp.lt.s32.totalorder %s28, 1
          %s523 = scalar_select %p522, %s28, 1
          %s524 = smul.addr %s523, 8
          %s525 = scalar_lea.vmem %s0, %s524
        $region84: #{tpu_custom_call.1} parent=79 // pred_fallthru
          _
        // Predicated region
        $region85: #{tpu_custom_call.1} parent=79 // pred_check
          %p526 = pneg %p74
        $region86: #{tpu_custom_call.1} parent=79 // pred_check_branch
          %528 = sbr.rel (%p526) target = $region88
        $region87: #{tpu_custom_call.1} parent=79 // pred_region
          %p529 = scmp.lt.s32.totalorder %s28, 1
          %s530 = scalar_select %p529, %s28, 1
          %s531 = smul.addr %s530, 8
          %s532 = scalar_lea.vmem %s1, %s531
        $region88: #{tpu_custom_call.1} parent=79 // pred_fallthru
          _
      $region80: #{tpu_custom_call.1} parent=5 // pred_fallthru
        _
      %p533 = scmp.le.s32.totalorder 1, %s28
      %p534 = scmp.lt.s32.totalorder %s28, 3
      %p535 = pnand %p533, %p534
      %p536 = pneg %p535
      // Predicated region
      $region89: #{tpu_custom_call.1} parent=5 // pred_check
        _
      $region90: #{tpu_custom_call.1} parent=5 // pred_check_branch
        %538 = sbr.rel (%p535) target = $region92
      $region91: #{tpu_custom_call.1} parent=5 // pred_region
        %s539 = ssub.s32 %s28, 1
        // Predicated region
        $region93: #{tpu_custom_call.1} parent=91 // pred_check
          %p540 = pneg %p227
        $region94: #{tpu_custom_call.1} parent=91 // pred_check_branch
          %542 = sbr.rel (%p540) target = $region96
        $region95: #{tpu_custom_call.1} parent=91 // pred_region
          %543 = dma.done [#allocation4], 128
        $region96: #{tpu_custom_call.1} parent=91 // pred_fallthru
          _
        %p544 = scmp.lt.s32.totalorder %s33, 1
        %s545 = scalar_select %p544, %s33, 1
        %s546 = smul.addr %s545, 8
        %s547 = scalar_lea.vmem %s0, %s546
        %p548 = pneg %p54
        %p549 = pneg %p51
        %p550 = scmp.lt.s32.totalorder %s33, 1
        %s551 = scalar_select %p550, %s33, 1
        %s552 = smul.addr %s551, 8
        %s553 = scalar_lea.vmem %s1, %s552
        %p554 = pneg %p80
        %p555 = pneg %p77
        %p556 = pneg %p101
        %p557 = pneg %p98
        %p558 = pneg %p122
        %p559 = pneg %p119
        %p560 = pneg %p143
        %p561 = pneg %p140
        %p562 = pneg %p164
        %p563 = pneg %p161
        %p564 = pneg %p185
        %p565 = pneg %p182
        %p566 = pneg %p206
        %p567 = pneg %p203
        %p568 = pneg %p227
        %p569 = pneg %p224
        %p570 = pneg %p248
        %p571 = pneg %p245
        %p572 = pneg %p269
        %p573 = pneg %p266
        %p574 = pneg %p290
        %p575 = pneg %p287
        %p576 = pneg %p311
        %p577 = pneg %p308
        %p578 = pneg %p332
        %p579 = pneg %p329
        %p580 = pneg %p353
        %p581 = pneg %p350
        %p582 = pneg %p374
        %p583 = pneg %p371
        %p584 = pneg %p395
        %p585 = pneg %p392
        %p586 = pneg %p416
        %p587 = pneg %p413
        %p588 = pneg %p442
        %p589 = pneg %p439
        %s590 = sand.u32 %s429, 1
        %s591 = scalar_lea.sflag [#allocation5], %s590
        %s592 = sand.u32 %s429, 1
        %s593 = smul.addr %s592, 8
        %s594 = scalar_lea.vmem [#allocation6], %s593
        %p595 = scmp.lt.s32.totalorder %s33, 1
        %s596 = scalar_select %p595, %s33, 1
        %s597 = smul.addr %s596, 8
        %s598 = scalar_lea.vmem %s0, %s597
        %p599 = scmp.lt.s32.totalorder %s33, 1
        %s600 = scalar_select %p599, %s33, 1
        %s601 = smul.addr %s600, 8
        %s602 = scalar_lea.vmem %s1, %s601
        %v604 = vld [vmem:[%s598] sm:$0xff]
        %v605 = vld [vmem:[%s602] sm:$0xff]
        %v606 = vld [vmem:[%s2] sm:$0x1]
        %v607 = vld [vmem:[%s3] sm:$0x1]
        %vm608 = vcmask 261120
        %v609 = vsel %vm608, %v604, 0.0
        %610 = vadd.xlane.f32.xlu0 %v609
        %v611 = vpop.xlane.xlu0 %610
        %v612 = vrcp.pop 32.0
        %v613 = vmul.f32 %v611, %v612
        %v614 = vsub.f32 %v604, %v613
        %v615 = vmul.f32 %v614, %v614
        %v616 = vsel %vm608, %v615, 0.0
        %617 = vadd.xlane.f32.xlu0 %v616
        %v618 = vpop.xlane.xlu0 %617
        %v619 = vmul.f32 %v618, %v612
        %v620 = vadd.f32 %v619, 1e-05
        %v621 = vrsqrt.pop %v620
        %v622 = vmul.f32 %v614, %v621
        %v624 = vlaneseq
        %v625 = vshrl.u32 %v624, 7
        %v626 = vsub.s32 0, %v625
        %v627 = vrot.slane %v606, %v626
        %v629 = vmul.f32 %v622, %v627
        %v631 = vlaneseq
        %v632 = vshrl.u32 %v631, 7
        %v633 = vsub.s32 0, %v632
        %v634 = vrot.slane %v607, %v633
        %v636 = vadd.f32 %v629, %v634
        %v637 = vpack.c.bf16 %v636, %v636
        %v638 = vpack.c.bf16 %v605, %v605
        %v639 = vld [vmem:[%s4] sm:$0xf]
        %v640 = vld [vmem:[%s4 + $0x4] sm:$0xf]
        %v641 = vld [vmem:[%s4 + $0x8] sm:$0xf]
        %v642 = vld [vmem:[%s4 + $0xc] sm:$0xf]
        %v643 = vld [vmem:[%s5] sm:$0x1]
        %v645 = vlaneseq
        %v646 = vshrl.u32 %v645, 7
        %v647 = vsub.s32 0, %v646
        %v648 = vrot.slane %v643, %v647
        %v654 = vunpack.c.l.b16 %v639
        %v655 = vunpack.c.l.b16 %v640
        %v656 = vunpack.c.l.b16 %v641
        %v657 = vunpack.c.l.b16 %v642
        %v658 = vpack.c.b16 %v655, %v654
        %v659 = vpack.c.b16 %v657, %v656
        %v663 = vsel %vm608, %v637, 0
        %665 = vmatprep.subr.bf16.mxu0 0
        %666 = vmatpush1.bf16.msra.mxu0 %v658
        %667 = vmatprep.subr.bf16.mxu0 0
        %668 = vmatpush1.bf16.msra.mxu0 %v659
        %669 = vmatprep.subr.bf16.mxu0 0
        %670 = vmatpush1.bf16.msra.mxu0 0
        %671 = vmatprep.subr.bf16.mxu0 0
        %672 = vmatpush1.bf16.msra.mxu0 0
        %673 = vmatprep.subr.bf16.mxu0 0
        %674 = vmatpush1.bf16.msra.mxu0 0
        %675 = vmatprep.subr.bf16.mxu0 0
        %676 = vmatpush1.bf16.msra.mxu0 0
        %677 = vmatprep.subr.bf16.mxu0 0
        %678 = vmatpush1.bf16.msra.mxu0 0
        %679 = vmatprep.subr.bf16.mxu0 0
        %680 = vmatpush1.bf16.msra.mxu0 0
        %681 = vmatprep.subr.bf16.mxu0 0
        %682 = vmatpush1.bf16.msra.mxu0 0
        %683 = vmatprep.subr.bf16.mxu0 0
        %684 = vmatpush1.bf16.msra.mxu0 0
        %685 = vmatprep.subr.bf16.mxu0 0
        %686 = vmatpush1.bf16.msra.mxu0 0
        %687 = vmatprep.subr.bf16.mxu0 0
        %688 = vmatpush1.bf16.msra.mxu0 0
        %689 = vmatprep.subr.bf16.mxu0 0
        %690 = vmatpush1.bf16.msra.mxu0 0
        %691 = vmatprep.subr.bf16.mxu0 0
        %692 = vmatpush1.bf16.msra.mxu0 0
        %693 = vmatprep.subr.bf16.mxu0 0
        %694 = vmatpush1.bf16.msra.mxu0 0
        %695 = vmatprep.subr.bf16.mxu0 0
        %696 = vmatpush1.bf16.msra.mxu0 0
        %697 = vmatprep.mubr.bf16.mxu0 0
        %698 = vmatmul.mubr.bf16.gmra.mrb[0].mxu0 %v663
        %v699 = vpop.f32.mrb[0].mxu0
        %v700 = vadd.f32 %v648, %v699
        %v701 = vpop.f32.mrb[0].mxu0
        %v702 = vpop.f32.mrb[0].mxu0
        %v703 = vpop.f32.mrb[0].mxu0
        %704 = vdwg.mxu0
        %v705 = vmul.f32 %v700, 0.0625
        %v706 = vld [vmem:[%s6] sm:$0xf]
        %v707 = vld [vmem:[%s6 + $0x4] sm:$0xf]
        %v708 = vld [vmem:[%s7] sm:$0x1]
        %v710 = vlaneseq
        %v711 = vshrl.u32 %v710, 7
        %v712 = vsub.s32 0, %v711
        %v713 = vrot.slane %v708, %v712
        %v717 = vunpack.c.l.b16 %v706
        %v718 = vunpack.c.l.b16 %v707
        %v719 = vpack.c.b16 %v718, %v717
        %vm721 = vcmask 130048
        %v723 = vsel %vm721, %v638, 0
        %725 = vmatprep.subr.bf16.mxu0 0
        %726 = vmatpush1.bf16.msra.mxu0 %v719
        %727 = vmatprep.subr.bf16.mxu0 0
        %728 = vmatpush1.bf16.msra.mxu0 0
        %729 = vmatprep.subr.bf16.mxu0 0
        %730 = vmatpush1.bf16.msra.mxu0 0
        %731 = vmatprep.subr.bf16.mxu0 0
        %732 = vmatpush1.bf16.msra.mxu0 0
        %733 = vmatprep.subr.bf16.mxu0 0
        %734 = vmatpush1.bf16.msra.mxu0 0
        %735 = vmatprep.subr.bf16.mxu0 0
        %736 = vmatpush1.bf16.msra.mxu0 0
        %737 = vmatprep.subr.bf16.mxu0 0
        %738 = vmatpush1.bf16.msra.mxu0 0
        %739 = vmatprep.subr.bf16.mxu0 0
        %740 = vmatpush1.bf16.msra.mxu0 0
        %741 = vmatprep.subr.bf16.mxu0 0
        %742 = vmatpush1.bf16.msra.mxu0 0
        %743 = vmatprep.subr.bf16.mxu0 0
        %744 = vmatpush1.bf16.msra.mxu0 0
        %745 = vmatprep.subr.bf16.mxu0 0
        %746 = vmatpush1.bf16.msra.mxu0 0
        %747 = vmatprep.subr.bf16.mxu0 0
        %748 = vmatpush1.bf16.msra.mxu0 0
        %749 = vmatprep.subr.bf16.mxu0 0
        %750 = vmatpush1.bf16.msra.mxu0 0
        %751 = vmatprep.subr.bf16.mxu0 0
        %752 = vmatpush1.bf16.msra.mxu0 0
        %753 = vmatprep.subr.bf16.mxu0 0
        %754 = vmatpush1.bf16.msra.mxu0 0
        %755 = vmatprep.subr.bf16.mxu0 0
        %756 = vmatpush1.bf16.msra.mxu0 0
        %757 = vmatprep.mubr.bf16.mxu0 0
        %758 = vmatmul.mubr.bf16.gmra.mrb[0].mxu0 %v723
        %v759 = vpop.f32.mrb[0].mxu0
        %v760 = vadd.f32 %v713, %v759
        %v761 = vpop.f32.mrb[0].mxu0
        %v762 = vpop.f32.mrb[0].mxu0
        %v763 = vpop.f32.mrb[0].mxu0
        %764 = vdwg.mxu0
        %v765 = vld [vmem:[#allocation3] sm:$0xf]
        %v766 = vld [vmem:[#allocation3 + $0x4] sm:$0xf]
        %v767 = vld [vmem:[%s9] sm:$0x1]
        %v769 = vlaneseq
        %v770 = vshrl.u32 %v769, 7
        %v771 = vsub.s32 0, %v770
        %v772 = vrot.slane %v767, %v771
        %v776 = vunpack.c.l.b16 %v765
        %v777 = vunpack.c.l.b16 %v766
        %v778 = vpack.c.b16 %v777, %v776
        %780 = vmatprep.subr.bf16.mxu0 0
        %781 = vmatpush1.bf16.msra.mxu0 %v778
        %782 = vmatprep.subr.bf16.mxu0 0
        %783 = vmatpush1.bf16.msra.mxu0 0
        %784 = vmatprep.subr.bf16.mxu0 0
        %785 = vmatpush1.bf16.msra.mxu0 0
        %786 = vmatprep.subr.bf16.mxu0 0
        %787 = vmatpush1.bf16.msra.mxu0 0
        %788 = vmatprep.subr.bf16.mxu0 0
        %789 = vmatpush1.bf16.msra.mxu0 0
        %790 = vmatprep.subr.bf16.mxu0 0
        %791 = vmatpush1.bf16.msra.mxu0 0
        %792 = vmatprep.subr.bf16.mxu0 0
        %793 = vmatpush1.bf16.msra.mxu0 0
        %794 = vmatprep.subr.bf16.mxu0 0
        %795 = vmatpush1.bf16.msra.mxu0 0
        %796 = vmatprep.subr.bf16.mxu0 0
        %797 = vmatpush1.bf16.msra.mxu0 0
        %798 = vmatprep.subr.bf16.mxu0 0
        %799 = vmatpush1.bf16.msra.mxu0 0
        %800 = vmatprep.subr.bf16.mxu0 0
        %801 = vmatpush1.bf16.msra.mxu0 0
        %802 = vmatprep.subr.bf16.mxu0 0
        %803 = vmatpush1.bf16.msra.mxu0 0
        %804 = vmatprep.subr.bf16.mxu0 0
        %805 = vmatpush1.bf16.msra.mxu0 0
        %806 = vmatprep.subr.bf16.mxu0 0
        %807 = vmatpush1.bf16.msra.mxu0 0
        %808 = vmatprep.subr.bf16.mxu0 0
        %809 = vmatpush1.bf16.msra.mxu0 0
        %810 = vmatprep.subr.bf16.mxu0 0
        %811 = vmatpush1.bf16.msra.mxu0 0
        %812 = vmatprep.mubr.bf16.mxu0 0
        %813 = vmatmul.mubr.bf16.gmra.mrb[0].mxu0 %v723
        %v814 = vpop.f32.mrb[0].mxu0
        %v815 = vadd.f32 %v772, %v814
        %v816 = vpop.f32.mrb[0].mxu0
        %v817 = vpop.f32.mrb[0].mxu0
        %v818 = vpop.f32.mrb[0].mxu0
        %819 = vdwg.mxu0
        %v820 = vpack.c.bf16 %v705, %v705
        %v821 = vpack.c.bf16 %v760, %v760
        %v822 = vpack.c.bf16 %v815, %v815
        %vm823 = vcmask 64512
        %v825 = vsel %vm823, %v820, 0
        %v828 = vsel %vm823, %v821, 0
        %830 = vmatprep.subr.bf16.mxu0 0
        %831 = vmatpush1.bf16.xpose.msra.mxu0 %v828
        %832 = vmatprep.subr.bf16.mxu0 0
        %833 = vmatpush1.bf16.xpose.msra.mxu0 0
        %834 = vmatprep.subr.bf16.mxu0 0
        %835 = vmatpush1.bf16.xpose.msra.mxu0 0
        %836 = vmatprep.subr.bf16.mxu0 0
        %837 = vmatpush1.bf16.xpose.msra.mxu0 0
        %838 = vmatprep.subr.bf16.mxu0 0
        %839 = vmatpush1.bf16.xpose.msra.mxu0 0
        %840 = vmatprep.subr.bf16.mxu0 0
        %841 = vmatpush1.bf16.xpose.msra.mxu0 0
        %842 = vmatprep.subr.bf16.mxu0 0
        %843 = vmatpush1.bf16.xpose.msra.mxu0 0
        %844 = vmatprep.subr.bf16.mxu0 0
        %845 = vmatpush1.bf16.xpose.msra.mxu0 0
        %846 = vmatprep.subr.bf16.mxu0 0
        %847 = vmatpush1.bf16.xpose.msra.mxu0 0
        %848 = vmatprep.subr.bf16.mxu0 0
        %849 = vmatpush1.bf16.xpose.msra.mxu0 0
        %850 = vmatprep.subr.bf16.mxu0 0
        %851 = vmatpush1.bf16.xpose.msra.mxu0 0
        %852 = vmatprep.subr.bf16.mxu0 0
        %853 = vmatpush1.bf16.xpose.msra.mxu0 0
        %854 = vmatprep.subr.bf16.mxu0 0
        %855 = vmatpush1.bf16.xpose.msra.mxu0 0
        %856 = vmatprep.subr.bf16.mxu0 0
        %857 = vmatpush1.bf16.xpose.msra.mxu0 0
        %858 = vmatprep.subr.bf16.mxu0 0
        %859 = vmatpush1.bf16.xpose.msra.mxu0 0
        %860 = vmatprep.subr.bf16.mxu0 0
        %861 = vmatpush1.bf16.xpose.msra.mxu0 0
        %862 = vmatprep.mubr.bf16.mxu0 0
        %863 = vmatmul.mubr.bf16.gmra.mrb[0].mxu0 %v825
        %v864 = vpop.f32.mrb[0].mxu0
        %v865 = vadd.f32 0.0, %v864
        %v866 = vpop.f32.mrb[0].mxu0
        %v867 = vpop.f32.mrb[0].mxu0
        %v868 = vpop.f32.mrb[0].mxu0
        %869 = vdwg.mxu0
        %v870 = vsel %vm823, %v865, -inf
        %871 = vmax.xlane.f32.xlu0 %v870
        %v872 = vpop.xlane.xlu0 %871
        %v873 = vsub.f32 %v865, %v872
        %v874 = vmul.f32 %v873, 1.442695
        %v875 = vpow.pop %v874
        %v876 = vsel %vm823, %v875, 0.0
        %877 = vadd.xlane.f32.xlu0 %v876
        %v878 = vpop.xlane.xlu0 %877
        %v879 = vrcp.pop %v878
        %v880 = vmul.f32 %v875, %v879
        %v881 = vpack.c.bf16 %v880, %v880
        %v883 = vsel %vm823, %v881, 0
        %vm885 = vcmask 1043456
        %v887 = vsel %vm885, %v822, 0
        %889 = vmatprep.subr.bf16.mxu0 0
        %890 = vmatpush1.bf16.msra.mxu0 %v887
        %891 = vmatprep.subr.bf16.mxu0 0
        %892 = vmatpush1.bf16.msra.mxu0 0
        %893 = vmatprep.subr.bf16.mxu0 0
        %894 = vmatpush1.bf16.msra.mxu0 0
        %895 = vmatprep.subr.bf16.mxu0 0
        %896 = vmatpush1.bf16.msra.mxu0 0
        %897 = vmatprep.subr.bf16.mxu0 0
        %898 = vmatpush1.bf16.msra.mxu0 0
        %899 = vmatprep.subr.bf16.mxu0 0
        %900 = vmatpush1.bf16.msra.mxu0 0
        %901 = vmatprep.subr.bf16.mxu0 0
        %902 = vmatpush1.bf16.msra.mxu0 0
        %903 = vmatprep.subr.bf16.mxu0 0
        %904 = vmatpush1.bf16.msra.mxu0 0
        %905 = vmatprep.subr.bf16.mxu0 0
        %906 = vmatpush1.bf16.msra.mxu0 0
        %907 = vmatprep.subr.bf16.mxu0 0
        %908 = vmatpush1.bf16.msra.mxu0 0
        %909 = vmatprep.subr.bf16.mxu0 0
        %910 = vmatpush1.bf16.msra.mxu0 0
        %911 = vmatprep.subr.bf16.mxu0 0
        %912 = vmatpush1.bf16.msra.mxu0 0
        %913 = vmatprep.subr.bf16.mxu0 0
        %914 = vmatpush1.bf16.msra.mxu0 0
        %915 = vmatprep.subr.bf16.mxu0 0
        %916 = vmatpush1.bf16.msra.mxu0 0
        %917 = vmatprep.subr.bf16.mxu0 0
        %918 = vmatpush1.bf16.msra.mxu0 0
        %919 = vmatprep.subr.bf16.mxu0 0
        %920 = vmatpush1.bf16.msra.mxu0 0
        %921 = vmatprep.mubr.bf16.mxu0 0
        %922 = vmatmul.mubr.bf16.gmra.mrb[0].mxu0 %v883
        %v923 = vpop.f32.mrb[0].mxu0
        %v924 = vadd.f32 0.0, %v923
        %v925 = vpop.f32.mrb[0].mxu0
        %v926 = vpop.f32.mrb[0].mxu0
        %v927 = vpop.f32.mrb[0].mxu0
        %928 = vdwg.mxu0
        %v929 = vpack.c.bf16 %v924, %v924
        %vm930 = vcmask 60416
        %931 = vst.msk [vmem:[#allocation2] sm:$0xf] %vm930, %v929
        %933 = vrot.lane.b32.xlu0 %v820, 120
        %v934 = vpop.permute.xlu0 %933
        %936 = vrot.lane.b32.xlu0 %v821, 120
        %v937 = vpop.permute.xlu0 %936
        %v939 = vsel %vm823, %v934, 0
        %v942 = vsel %vm823, %v937, 0
        %944 = vmatprep.subr.bf16.mxu0 0
        %945 = vmatpush1.bf16.xpose.msra.mxu0 %v942
        %946 = vmatprep.subr.bf16.mxu0 0
        %947 = vmatpush1.bf16.xpose.msra.mxu0 0
        %948 = vmatprep.subr.bf16.mxu0 0
        %949 = vmatpush1.bf16.xpose.msra.mxu0 0
        %950 = vmatprep.subr.bf16.mxu0 0
        %951 = vmatpush1.bf16.xpose.msra.mxu0 0
        %952 = vmatprep.subr.bf16.mxu0 0
        %953 = vmatpush1.bf16.xpose.msra.mxu0 0
        %954 = vmatprep.subr.bf16.mxu0 0
        %955 = vmatpush1.bf16.xpose.msra.mxu0 0
        %956 = vmatprep.subr.bf16.mxu0 0
        %957 = vmatpush1.bf16.xpose.msra.mxu0 0
        %958 = vmatprep.subr.bf16.mxu0 0
        %959 = vmatpush1.bf16.xpose.msra.mxu0 0
        %960 = vmatprep.subr.bf16.mxu0 0
        %961 = vmatpush1.bf16.xpose.msra.mxu0 0
        %962 = vmatprep.subr.bf16.mxu0 0
        %963 = vmatpush1.bf16.xpose.msra.mxu0 0
        %964 = vmatprep.subr.bf16.mxu0 0
        %965 = vmatpush1.bf16.xpose.msra.mxu0 0
        %966 = vmatprep.subr.bf16.mxu0 0
        %967 = vmatpush1.bf16.xpose.msra.mxu0 0
        %968 = vmatprep.subr.bf16.mxu0 0
        %969 = vmatpush1.bf16.xpose.msra.mxu0 0
        %970 = vmatprep.subr.bf16.mxu0 0
        %971 = vmatpush1.bf16.xpose.msra.mxu0 0
        %972 = vmatprep.subr.bf16.mxu0 0
        %973 = vmatpush1.bf16.xpose.msra.mxu0 0
        %974 = vmatprep.subr.bf16.mxu0 0
        %975 = vmatpush1.bf16.xpose.msra.mxu0 0
        %976 = vmatprep.mubr.bf16.mxu0 0
        %977 = vmatmul.mubr.bf16.gmra.mrb[0].mxu0 %v939
        %v978 = vpop.f32.mrb[0].mxu0
        %v979 = vadd.f32 0.0, %v978
        %v980 = vpop.f32.mrb[0].mxu0
        %v981 = vpop.f32.mrb[0].mxu0
        %v982 = vpop.f32.mrb[0].mxu0
        %983 = vdwg.mxu0
        %v984 = vsel %vm823, %v979, -inf
        %985 = vmax.xlane.f32.xlu0 %v984
        %v986 = vpop.xlane.xlu0 %985
        %v987 = vsub.f32 %v979, %v986
        %v988 = vmul.f32 %v987, 1.442695
        %v989 = vpow.pop %v988
        %v990 = vsel %vm823, %v989, 0.0
        %991 = vadd.xlane.f32.xlu0 %v990
        %v992 = vpop.xlane.xlu0 %991
        %v993 = vrcp.pop %v992
        %v994 = vmul.f32 %v989, %v993
        %v995 = vpack.c.bf16 %v994, %v994
        %997 = vrot.lane.b32.xlu0 %v822, 120
        %v998 = vpop.permute.xlu0 %997
        %v1000 = vsel %vm823, %v995, 0
        %v1003 = vsel %vm885, %v998, 0
        %1005 = vmatprep.subr.bf16.mxu0 0
        %1006 = vmatpush1.bf16.msra.mxu0 %v1003
        %1007 = vmatprep.subr.bf16.mxu0 0
        %1008 = vmatpush1.bf16.msra.mxu0 0
        %1009 = vmatprep.subr.bf16.mxu0 0
        %1010 = vmatpush1.bf16.msra.mxu0 0
        %1011 = vmatprep.subr.bf16.mxu0 0
        %1012 = vmatpush1.bf16.msra.mxu0 0
        %1013 = vmatprep.subr.bf16.mxu0 0
        %1014 = vmatpush1.bf16.msra.mxu0 0
        %1015 = vmatprep.subr.bf16.mxu0 0
        %1016 = vmatpush1.bf16.msra.mxu0 0
        %1017 = vmatprep.subr.bf16.mxu0 0
        %1018 = vmatpush1.bf16.msra.mxu0 0
        %1019 = vmatprep.subr.bf16.mxu0 0
        %1020 = vmatpush1.bf16.msra.mxu0 0
        %1021 = vmatprep.subr.bf16.mxu0 0
        %1022 = vmatpush1.bf16.msra.mxu0 0
        %1023 = vmatprep.subr.bf16.mxu0 0
        %1024 = vmatpush1.bf16.msra.mxu0 0
        %1025 = vmatprep.subr.bf16.mxu0 0
        %1026 = vmatpush1.bf16.msra.mxu0 0
        %1027 = vmatprep.subr.bf16.mxu0 0
        %1028 = vmatpush1.bf16.msra.mxu0 0
        %1029 = vmatprep.subr.bf16.mxu0 0
        %1030 = vmatpush1.bf16.msra.mxu0 0
        %1031 = vmatprep.subr.bf16.mxu0 0
        %1032 = vmatpush1.bf16.msra.mxu0 0
        %1033 = vmatprep.subr.bf16.mxu0 0
        %1034 = vmatpush1.bf16.msra.mxu0 0
        %1035 = vmatprep.subr.bf16.mxu0 0
        %1036 = vmatpush1.bf16.msra.mxu0 0
        %1037 = vmatprep.mubr.bf16.mxu0 0
        %1038 = vmatmul.mubr.bf16.gmra.mrb[0].mxu0 %v1000
        %v1039 = vpop.f32.mrb[0].mxu0
        %v1040 = vadd.f32 0.0, %v1039
        %v1041 = vpop.f32.mrb[0].mxu0
        %v1042 = vpop.f32.mrb[0].mxu0
        %v1043 = vpop.f32.mrb[0].mxu0
        %1044 = vdwg.mxu0
        %v1045 = vpack.c.bf16 %v1040, %v1040
        %v1047 = vunpack.c.l.b16 %v1045
        %v1048 = vpack.c.b16 %v1047, %v1047
        %1049 = vrot.lane.b32.xlu0 %v1048, 8
        %v1050 = vpop.permute.xlu0 %1049
        %vm1052 = vcmask 126016
        %1053 = vst.msk [vmem:[#allocation2] sm:$0xf] %vm1052, %v1050
        %1054 = vrot.lane.b32.xlu0 %v820, 112
        %v1055 = vpop.permute.xlu0 %1054
        %1056 = vrot.lane.b32.xlu0 %v821, 112
        %v1057 = vpop.permute.xlu0 %1056
        %v1059 = vsel %vm823, %v1055, 0
        %v1062 = vsel %vm823, %v1057, 0
        %1064 = vmatprep.subr.bf16.mxu0 0
        %1065 = vmatpush1.bf16.xpose.msra.mxu0 %v1062
        %1066 = vmatprep.subr.bf16.mxu0 0
        %1067 = vmatpush1.bf16.xpose.msra.mxu0 0
        %1068 = vmatprep.subr.bf16.mxu0 0
        %1069 = vmatpush1.bf16.xpose.msra.mxu0 0
        %1070 = vmatprep.subr.bf16.mxu0 0
        %1071 = vmatpush1.bf16.xpose.msra.mxu0 0
        %1072 = vmatprep.subr.bf16.mxu0 0
        %1073 = vmatpush1.bf16.xpose.msra.mxu0 0
        %1074 = vmatprep.subr.bf16.mxu0 0
        %1075 = vmatpush1.bf16.xpose.msra.mxu0 0
        %1076 = vmatprep.subr.bf16.mxu0 0
        %1077 = vmatpush1.bf16.xpose.msra.mxu0 0
        %1078 = vmatprep.subr.bf16.mxu0 0
        %1079 = vmatpush1.bf16.xpose.msra.mxu0 0
        %1080 = vmatprep.subr.bf16.mxu0 0
        %1081 = vmatpush1.bf16.xpose.msra.mxu0 0
        %1082 = vmatprep.subr.bf16.mxu0 0
        %1083 = vmatpush1.bf16.xpose.msra.mxu0 0
        %1084 = vmatprep.subr.bf16.mxu0 0
        %1085 = vmatpush1.bf16.xpose.msra.mxu0 0
        %1086 = vmatprep.subr.bf16.mxu0 0
        %1087 = vmatpush1.bf16.xpose.msra.mxu0 0
        %1088 = vmatprep.subr.bf16.mxu0 0
        %1089 = vmatpush1.bf16.xpose.msra.mxu0 0
        %1090 = vmatprep.subr.bf16.mxu0 0
        %1091 = vmatpush1.bf16.xpose.msra.mxu0 0
        %1092 = vmatprep.subr.bf16.mxu0 0
        %1093 = vmatpush1.bf16.xpose.msra.mxu0 0
        %1094 = vmatprep.subr.bf16.mxu0 0
        %1095 = vmatpush1.bf16.xpose.msra.mxu0 0
        %1096 = vmatprep.mubr.bf16.mxu0 0
        %1097 = vmatmul.mubr.bf16.gmra.mrb[0].mxu0 %v1059
        %v1098 = vpop.f32.mrb[0].mxu0
        %v1099 = vadd.f32 0.0, %v1098
        %v1100 = vpop.f32.mrb[0].mxu0
        %v1101 = vpop.f32.mrb[0].mxu0
        %v1102 = vpop.f32.mrb[0].mxu0
        %1103 = vdwg.mxu0
        %v1104 = vsel %vm823, %v1099, -inf
        %1105 = vmax.xlane.f32.xlu0 %v1104
        %v1106 = vpop.xlane.xlu0 %1105
        %v1107 = vsub.f32 %v1099, %v1106
        %v1108 = vmul.f32 %v1107, 1.442695
        %v1109 = vpow.pop %v1108
        %v1110 = vsel %vm823, %v1109, 0.0
        %1111 = vadd.xlane.f32.xlu0 %v1110
        %v1112 = vpop.xlane.xlu0 %1111
        %v1113 = vrcp.pop %v1112
        %v1114 = vmul.f32 %v1109, %v1113
        %v1115 = vpack.c.bf16 %v1114, %v1114
        %1116 = vrot.lane.b32.xlu0 %v822, 112
        %v1117 = vpop.permute.xlu0 %1116
        %v1119 = vsel %vm823, %v1115, 0
        %v1122 = vsel %vm885, %v1117, 0
        %1124 = vmatprep.subr.bf16.mxu0 0
        %1125 = vmatpush1.bf16.msra.mxu0 %v1122
        %1126 = vmatprep.subr.bf16.mxu0 0
        %1127 = vmatpush1.bf16.msra.mxu0 0
        %1128 = vmatprep.subr.bf16.mxu0 0
        %1129 = vmatpush1.bf16.msra.mxu0 0
        %1130 = vmatprep.subr.bf16.mxu0 0
        %1131 = vmatpush1.bf16.msra.mxu0 0
        %1132 = vmatprep.subr.bf16.mxu0 0
        %1133 = vmatpush1.bf16.msra.mxu0 0
        %1134 = vmatprep.subr.bf16.mxu0 0
        %1135 = vmatpush1.bf16.msra.mxu0 0
        %1136 = vmatprep.subr.bf16.mxu0 0
        %1137 = vmatpush1.bf16.msra.mxu0 0
        %1138 = vmatprep.subr.bf16.mxu0 0
        %1139 = vmatpush1.bf16.msra.mxu0 0
        %1140 = vmatprep.subr.bf16.mxu0 0
        %1141 = vmatpush1.bf16.msra.mxu0 0
        %1142 = vmatprep.subr.bf16.mxu0 0
        %1143 = vmatpush1.bf16.msra.mxu0 0
        %1144 = vmatprep.subr.bf16.mxu0 0
        %1145 = vmatpush1.bf16.msra.mxu0 0
        %1146 = vmatprep.subr.bf16.mxu0 0
        %1147 = vmatpush1.bf16.msra.mxu0 0
        %1148 = vmatprep.subr.bf16.mxu0 0
        %1149 = vmatpush1.bf16.msra.mxu0 0
        %1150 = vmatprep.subr.bf16.mxu0 0
        %1151 = vmatpush1.bf16.msra.mxu0 0
        %1152 = vmatprep.subr.bf16.mxu0 0
        %1153 = vmatpush1.bf16.msra.mxu0 0
        %1154 = vmatprep.subr.bf16.mxu0 0
        %1155 = vmatpush1.bf16.msra.mxu0 0
        %1156 = vmatprep.mubr.bf16.mxu0 0
        %1157 = vmatmul.mubr.bf16.gmra.mrb[0].mxu0 %v1119
        %v1158 = vpop.f32.mrb[0].mxu0
        %v1159 = vadd.f32 0.0, %v1158
        %v1160 = vpop.f32.mrb[0].mxu0
        %v1161 = vpop.f32.mrb[0].mxu0
        %v1162 = vpop.f32.mrb[0].mxu0
        %1163 = vdwg.mxu0
        %v1164 = vpack.c.bf16 %v1159, %v1159
        %v1166 = vunpack.c.l.b16 %v1164
        %v1167 = vpack.c.b16 %v1166, %v1166
        %1168 = vrot.lane.b32.xlu0 %v1167, 16
        %v1169 = vpop.permute.xlu0 %1168
        %vm1171 = vcmask 191616
        %1172 = vst.msk [vmem:[#allocation2] sm:$0xf] %vm1171, %v1169
        %1173 = vrot.lane.b32.xlu0 %v820, 104
        %v1174 = vpop.permute.xlu0 %1173
        %1175 = vrot.lane.b32.xlu0 %v821, 104
        %v1176 = vpop.permute.xlu0 %1175
        %v1178 = vsel %vm823, %v1174, 0
        %v1181 = vsel %vm823, %v1176, 0
        %1183 = vmatprep.subr.bf16.mxu0 0
        %1184 = vmatpush1.bf16.xpose.msra.mxu0 %v1181
        %1185 = vmatprep.subr.bf16.mxu0 0
        %1186 = vmatpush1.bf16.xpose.msra.mxu0 0
        %1187 = vmatprep.subr.bf16.mxu0 0
        %1188 = vmatpush1.bf16.xpose.msra.mxu0 0
        %1189 = vmatprep.subr.bf16.mxu0 0
        %1190 = vmatpush1.bf16.xpose.msra.mxu0 0
        %1191 = vmatprep.subr.bf16.mxu0 0
        %1192 = vmatpush1.bf16.xpose.msra.mxu0 0
        %1193 = vmatprep.subr.bf16.mxu0 0
        %1194 = vmatpush1.bf16.xpose.msra.mxu0 0
        %1195 = vmatprep.subr.bf16.mxu0 0
        %1196 = vmatpush1.bf16.xpose.msra.mxu0 0
        %1197 = vmatprep.subr.bf16.mxu0 0
        %1198 = vmatpush1.bf16.xpose.msra.mxu0 0
        %1199 = vmatprep.subr.bf16.mxu0 0
        %1200 = vmatpush1.bf16.xpose.msra.mxu0 0
        %1201 = vmatprep.subr.bf16.mxu0 0
        %1202 = vmatpush1.bf16.xpose.msra.mxu0 0
        %1203 = vmatprep.subr.bf16.mxu0 0
        %1204 = vmatpush1.bf16.xpose.msra.mxu0 0
        %1205 = vmatprep.subr.bf16.mxu0 0
        %1206 = vmatpush1.bf16.xpose.msra.mxu0 0
        %1207 = vmatprep.subr.bf16.mxu0 0
        %1208 = vmatpush1.bf16.xpose.msra.mxu0 0
        %1209 = vmatprep.subr.bf16.mxu0 0
        %1210 = vmatpush1.bf16.xpose.msra.mxu0 0
        %1211 = vmatprep.subr.bf16.mxu0 0
        %1212 = vmatpush1.bf16.xpose.msra.mxu0 0
        %1213 = vmatprep.subr.bf16.mxu0 0
        %1214 = vmatpush1.bf16.xpose.msra.mxu0 0
        %1215 = vmatprep.mubr.bf16.mxu0 0
        %1216 = vmatmul.mubr.bf16.gmra.mrb[0].mxu0 %v1178
        %v1217 = vpop.f32.mrb[0].mxu0
        %v1218 = vadd.f32 0.0, %v1217
        %v1219 = vpop.f32.mrb[0].mxu0
        %v1220 = vpop.f32.mrb[0].mxu0
        %v1221 = vpop.f32.mrb[0].mxu0
        %1222 = vdwg.mxu0
        %v1223 = vsel %vm823, %v1218, -inf
        %1224 = vmax.xlane.f32.xlu0 %v1223
        %v1225 = vpop.xlane.xlu0 %1224
        %v1226 = vsub.f32 %v1218, %v1225
        %v1227 = vmul.f32 %v1226, 1.442695
        %v1228 = vpow.pop %v1227
        %v1229 = vsel %vm823, %v1228, 0.0
        %1230 = vadd.xlane.f32.xlu0 %v1229
        %v1231 = vpop.xlane.xlu0 %1230
        %v1232 = vrcp.pop %v1231
        %v1233 = vmul.f32 %v1228, %v1232
        %v1234 = vpack.c.bf16 %v1233, %v1233
        %1235 = vrot.lane.b32.xlu0 %v822, 104
        %v1236 = vpop.permute.xlu0 %1235
        %v1238 = vsel %vm823, %v1234, 0
        %v1241 = vsel %vm885, %v1236, 0
        %1243 = vmatprep.subr.bf16.mxu0 0
        %1244 = vmatpush1.bf16.msra.mxu0 %v1241
        %1245 = vmatprep.subr.bf16.mxu0 0
        %1246 = vmatpush1.bf16.msra.mxu0 0
        %1247 = vmatprep.subr.bf16.mxu0 0
        %1248 = vmatpush1.bf16.msra.mxu0 0
        %1249 = vmatprep.subr.bf16.mxu0 0
        %1250 = vmatpush1.bf16.msra.mxu0 0
        %1251 = vmatprep.subr.bf16.mxu0 0
        %1252 = vmatpush1.bf16.msra.mxu0 0
        %1253 = vmatprep.subr.bf16.mxu0 0
        %1254 = vmatpush1.bf16.msra.mxu0 0
        %1255 = vmatprep.subr.bf16.mxu0 0
        %1256 = vmatpush1.bf16.msra.mxu0 0
        %1257 = vmatprep.subr.bf16.mxu0 0
        %1258 = vmatpush1.bf16.msra.mxu0 0
        %1259 = vmatprep.subr.bf16.mxu0 0
        %1260 = vmatpush1.bf16.msra.mxu0 0
        %1261 = vmatprep.subr.bf16.mxu0 0
        %1262 = vmatpush1.bf16.msra.mxu0 0
        %1263 = vmatprep.subr.bf16.mxu0 0
        %1264 = vmatpush1.bf16.msra.mxu0 0
        %1265 = vmatprep.subr.bf16.mxu0 0
        %1266 = vmatpush1.bf16.msra.mxu0 0
        %1267 = vmatprep.subr.bf16.mxu0 0
        %1268 = vmatpush1.bf16.msra.mxu0 0
        %1269 = vmatprep.subr.bf16.mxu0 0
        %1270 = vmatpush1.bf16.msra.mxu0 0
        %1271 = vmatprep.subr.bf16.mxu0 0
        %1272 = vmatpush1.bf16.msra.mxu0 0
        %1273 = vmatprep.subr.bf16.mxu0 0
        %1274 = vmatpush1.bf16.msra.mxu0 0
        %1275 = vmatprep.mubr.bf16.mxu0 0
        %1276 = vmatmul.mubr.bf16.gmra.mrb[0].mxu0 %v1238
        %v1277 = vpop.f32.mrb[0].mxu0
        %v1278 = vadd.f32 0.0, %v1277
        %v1279 = vpop.f32.mrb[0].mxu0
        %v1280 = vpop.f32.mrb[0].mxu0
        %v1281 = vpop.f32.mrb[0].mxu0
        %1282 = vdwg.mxu0
        %v1283 = vpack.c.bf16 %v1278, %v1278
        %v1285 = vunpack.c.l.b16 %v1283
        %v1286 = vpack.c.b16 %v1285, %v1285
        %1287 = vrot.lane.b32.xlu0 %v1286, 24
        %v1288 = vpop.permute.xlu0 %1287
        %vm1290 = vcmask 257216
        %1291 = vst.msk [vmem:[#allocation2] sm:$0xf] %vm1290, %v1288
        %v1292 = vld [vmem:[#allocation2] sm:$0xf]
        %v1293 = vld [vmem:[%s10] sm:$0xf]
        %v1294 = vld [vmem:[%s10 + $0x4] sm:$0xf]
        %v1295 = vld [vmem:[%s10 + $0x8] sm:$0xf]
        %v1296 = vld [vmem:[%s10 + $0xc] sm:$0xf]
        %v1297 = vld [vmem:[%s11] sm:$0x1]
        %v1299 = vlaneseq
        %v1300 = vshrl.u32 %v1299, 7
        %v1301 = vsub.s32 0, %v1300
        %v1302 = vrot.slane %v1297, %v1301
        %v1308 = vunpack.c.l.b16 %v1293
        %v1309 = vunpack.c.l.b16 %v1294
        %v1310 = vunpack.c.l.b16 %v1295
        %v1311 = vunpack.c.l.b16 %v1296
        %v1312 = vpack.c.b16 %v1309, %v1308
        %v1313 = vpack.c.b16 %v1311, %v1310
        %v1317 = vsel %vm608, %v1292, 0
        %1319 = vmatprep.subr.bf16.mxu0 0
        %1320 = vmatpush1.bf16.msra.mxu0 %v1312
        %1321 = vmatprep.subr.bf16.mxu0 0
        %1322 = vmatpush1.bf16.msra.mxu0 %v1313
        %1323 = vmatprep.subr.bf16.mxu0 0
        %1324 = vmatpush1.bf16.msra.mxu0 0
        %1325 = vmatprep.subr.bf16.mxu0 0
        %1326 = vmatpush1.bf16.msra.mxu0 0
        %1327 = vmatprep.subr.bf16.mxu0 0
        %1328 = vmatpush1.bf16.msra.mxu0 0
        %1329 = vmatprep.subr.bf16.mxu0 0
        %1330 = vmatpush1.bf16.msra.mxu0 0
        %1331 = vmatprep.subr.bf16.mxu0 0
        %1332 = vmatpush1.bf16.msra.mxu0 0
        %1333 = vmatprep.subr.bf16.mxu0 0
        %1334 = vmatpush1.bf16.msra.mxu0 0
        %1335 = vmatprep.subr.bf16.mxu0 0
        %1336 = vmatpush1.bf16.msra.mxu0 0
        %1337 = vmatprep.subr.bf16.mxu0 0
        %1338 = vmatpush1.bf16.msra.mxu0 0
        %1339 = vmatprep.subr.bf16.mxu0 0
        %1340 = vmatpush1.bf16.msra.mxu0 0
        %1341 = vmatprep.subr.bf16.mxu0 0
        %1342 = vmatpush1.bf16.msra.mxu0 0
        %1343 = vmatprep.subr.bf16.mxu0 0
        %1344 = vmatpush1.bf16.msra.mxu0 0
        %1345 = vmatprep.subr.bf16.mxu0 0
        %1346 = vmatpush1.bf16.msra.mxu0 0
        %1347 = vmatprep.subr.bf16.mxu0 0
        %1348 = vmatpush1.bf16.msra.mxu0 0
        %1349 = vmatprep.subr.bf16.mxu0 0
        %1350 = vmatpush1.bf16.msra.mxu0 0
        %1351 = vmatprep.mubr.bf16.mxu0 0
        %1352 = vmatmul.mubr.bf16.gmra.mrb[0].mxu0 %v1317
        %v1353 = vpop.f32.mrb[0].mxu0
        %v1354 = vadd.f32 %v1302, %v1353
        %v1355 = vpop.f32.mrb[0].mxu0
        %v1356 = vpop.f32.mrb[0].mxu0
        %v1357 = vpop.f32.mrb[0].mxu0
        %1358 = vdwg.mxu0
        %v1359 = vadd.f32 %v1354, %v604
        %v1360 = vld [vmem:[%s12] sm:$0x1]
        %v1361 = vld [vmem:[%s13] sm:$0x1]
        %v1362 = vsel %vm608, %v1359, 0.0
        %1363 = vadd.xlane.f32.xlu0 %v1362
        %v1364 = vpop.xlane.xlu0 %1363
        %v1365 = vmul.f32 %v1364, %v612
        %v1366 = vsub.f32 %v1359, %v1365
        %v1367 = vmul.f32 %v1366, %v1366
        %v1368 = vsel %vm608, %v1367, 0.0
        %1369 = vadd.xlane.f32.xlu0 %v1368
        %v1370 = vpop.xlane.xlu0 %1369
        %v1371 = vmul.f32 %v1370, %v612
        %v1372 = vadd.f32 %v1371, 1e-05
        %v1373 = vrsqrt.pop %v1372
        %v1374 = vmul.f32 %v1366, %v1373
        %v1376 = vlaneseq
        %v1377 = vshrl.u32 %v1376, 7
        %v1378 = vsub.s32 0, %v1377
        %v1379 = vrot.slane %v1360, %v1378
        %v1381 = vmul.f32 %v1374, %v1379
        %v1383 = vlaneseq
        %v1384 = vshrl.u32 %v1383, 7
        %v1385 = vsub.s32 0, %v1384
        %v1386 = vrot.slane %v1361, %v1385
        %v1388 = vadd.f32 %v1381, %v1386
        %v1389 = vpack.c.bf16 %v1388, %v1388
        %v1390 = vld [vmem:[%s14] sm:$0xf]
        %v1391 = vld [vmem:[%s14 + $0x4] sm:$0xf]
        %v1392 = vld [vmem:[%s14 + $0x8] sm:$0xf]
        %v1393 = vld [vmem:[%s14 + $0xc] sm:$0xf]
        %v1394 = vld [vmem:[%s15] sm:$0x1]
        %v1396 = vlaneseq
        %v1397 = vshrl.u32 %v1396, 7
        %v1398 = vsub.s32 0, %v1397
        %v1399 = vrot.slane %v1394, %v1398
        %v1405 = vunpack.c.l.b16 %v1390
        %v1406 = vunpack.c.l.b16 %v1391
        %v1407 = vunpack.c.l.b16 %v1392
        %v1408 = vunpack.c.l.b16 %v1393
        %v1409 = vpack.c.b16 %v1406, %v1405
        %v1410 = vpack.c.b16 %v1408, %v1407
        %v1414 = vsel %vm608, %v1389, 0
        %1416 = vmatprep.subr.bf16.mxu0 0
        %1417 = vmatpush1.bf16.msra.mxu0 %v1409
        %1418 = vmatprep.subr.bf16.mxu0 0
        %1419 = vmatpush1.bf16.msra.mxu0 %v1410
        %1420 = vmatprep.subr.bf16.mxu0 0
        %1421 = vmatpush1.bf16.msra.mxu0 0
        %1422 = vmatprep.subr.bf16.mxu0 0
        %1423 = vmatpush1.bf16.msra.mxu0 0
        %1424 = vmatprep.subr.bf16.mxu0 0
        %1425 = vmatpush1.bf16.msra.mxu0 0
        %1426 = vmatprep.subr.bf16.mxu0 0
        %1427 = vmatpush1.bf16.msra.mxu0 0
        %1428 = vmatprep.subr.bf16.mxu0 0
        %1429 = vmatpush1.bf16.msra.mxu0 0
        %1430 = vmatprep.subr.bf16.mxu0 0
        %1431 = vmatpush1.bf16.msra.mxu0 0
        %1432 = vmatprep.subr.bf16.mxu0 0
        %1433 = vmatpush1.bf16.msra.mxu0 0
        %1434 = vmatprep.subr.bf16.mxu0 0
        %1435 = vmatpush1.bf16.msra.mxu0 0
        %1436 = vmatprep.subr.bf16.mxu0 0
        %1437 = vmatpush1.bf16.msra.mxu0 0
        %1438 = vmatprep.subr.bf16.mxu0 0
        %1439 = vmatpush1.bf16.msra.mxu0 0
        %1440 = vmatprep.subr.bf16.mxu0 0
        %1441 = vmatpush1.bf16.msra.mxu0 0
        %1442 = vmatprep.subr.bf16.mxu0 0
        %1443 = vmatpush1.bf16.msra.mxu0 0
        %1444 = vmatprep.subr.bf16.mxu0 0
        %1445 = vmatpush1.bf16.msra.mxu0 0
        %1446 = vmatprep.subr.bf16.mxu0 0
        %1447 = vmatpush1.bf16.msra.mxu0 0
        %1448 = vmatprep.mubr.bf16.mxu0 0
        %1449 = vmatmul.mubr.bf16.gmra.mrb[0].mxu0 %v1414
        %v1450 = vpop.f32.mrb[0].mxu0
        %v1451 = vadd.f32 %v1399, %v1450
        %v1452 = vpop.f32.mrb[0].mxu0
        %v1453 = vpop.f32.mrb[0].mxu0
        %v1454 = vpop.f32.mrb[0].mxu0
        %1455 = vdwg.mxu0
        %v1456 = vmul.f32 %v1451, 0.5
        %v1457 = vmul.f32 %v1451, 0.70710677
        %v1458 = verf.f32.pop %v1457
        %v1459 = vadd.f32 %v1458, 1.0
        %v1460 = vmul.f32 %v1456, %v1459
        %v1461 = vpack.c.bf16 %v1460, %v1460
        %v1462 = vld [vmem:[%s16] sm:$0xf]
        %v1463 = vld [vmem:[%s16 + $0x4] sm:$0xf]
        %v1464 = vld [vmem:[%s16 + $0x8] sm:$0xf]
        %v1465 = vld [vmem:[%s16 + $0xc] sm:$0xf]
        %v1466 = vld [vmem:[%s16 + $0x10] sm:$0xf]
        %v1467 = vld [vmem:[%s16 + $0x14] sm:$0xf]
        %v1468 = vld [vmem:[%s16 + $0x18] sm:$0xf]
        %v1469 = vld [vmem:[%s16 + $0x1c] sm:$0xf]
        %v1470 = vld [vmem:[%s16 + $0x20] sm:$0xf]
        %v1471 = vld [vmem:[%s16 + $0x24] sm:$0xf]
        %v1472 = vld [vmem:[%s16 + $0x28] sm:$0xf]
        %v1473 = vld [vmem:[%s16 + $0x2c] sm:$0xf]
        %v1474 = vld [vmem:[%s16 + $0x30] sm:$0xf]
        %v1475 = vld [vmem:[%s16 + $0x34] sm:$0xf]
        %v1476 = vld [vmem:[%s16 + $0x38] sm:$0xf]
        %v1477 = vld [vmem:[%s16 + $0x3c] sm:$0xf]
        %v1478 = vld [vmem:[%s17] sm:$0x1]
        %v1480 = vlaneseq
        %v1481 = vshrl.u32 %v1480, 7
        %v1482 = vsub.s32 0, %v1481
        %v1483 = vrot.slane %v1478, %v1482
        %v1501 = vunpack.c.l.b16 %v1462
        %v1502 = vunpack.c.l.b16 %v1463
        %v1503 = vunpack.c.l.b16 %v1464
        %v1504 = vunpack.c.l.b16 %v1465
        %v1505 = vunpack.c.l.b16 %v1466
        %v1506 = vunpack.c.l.b16 %v1467
        %v1507 = vunpack.c.l.b16 %v1468
        %v1508 = vunpack.c.l.b16 %v1469
        %v1509 = vunpack.c.l.b16 %v1470
        %v1510 = vunpack.c.l.b16 %v1471
        %v1511 = vunpack.c.l.b16 %v1472
        %v1512 = vunpack.c.l.b16 %v1473
        %v1513 = vunpack.c.l.b16 %v1474
        %v1514 = vunpack.c.l.b16 %v1475
        %v1515 = vunpack.c.l.b16 %v1476
        %v1516 = vunpack.c.l.b16 %v1477
        %v1517 = vpack.c.b16 %v1502, %v1501
        %v1518 = vpack.c.b16 %v1504, %v1503
        %v1519 = vpack.c.b16 %v1506, %v1505
        %v1520 = vpack.c.b16 %v1508, %v1507
        %v1521 = vpack.c.b16 %v1510, %v1509
        %v1522 = vpack.c.b16 %v1512, %v1511
        %v1523 = vpack.c.b16 %v1514, %v1513
        %v1524 = vpack.c.b16 %v1516, %v1515
        %1533 = vmatprep.subr.bf16.mxu0 0
        %1534 = vmatpush1.bf16.msra.mxu0 %v1517
        %1535 = vmatprep.subr.bf16.mxu0 0
        %1536 = vmatpush1.bf16.msra.mxu0 %v1518
        %1537 = vmatprep.subr.bf16.mxu0 0
        %1538 = vmatpush1.bf16.msra.mxu0 %v1519
        %1539 = vmatprep.subr.bf16.mxu0 0
        %1540 = vmatpush1.bf16.msra.mxu0 %v1520
        %1541 = vmatprep.subr.bf16.mxu0 0
        %1542 = vmatpush1.bf16.msra.mxu0 %v1521
        %1543 = vmatprep.subr.bf16.mxu0 0
        %1544 = vmatpush1.bf16.msra.mxu0 %v1522
        %1545 = vmatprep.subr.bf16.mxu0 0
        %1546 = vmatpush1.bf16.msra.mxu0 %v1523
        %1547 = vmatprep.subr.bf16.mxu0 0
        %1548 = vmatpush1.bf16.msra.mxu0 %v1524
        %1549 = vmatprep.subr.bf16.mxu0 0
        %1550 = vmatpush1.bf16.msra.mxu0 0
        %1551 = vmatprep.subr.bf16.mxu0 0
        %1552 = vmatpush1.bf16.msra.mxu0 0
        %1553 = vmatprep.subr.bf16.mxu0 0
        %1554 = vmatpush1.bf16.msra.mxu0 0
        %1555 = vmatprep.subr.bf16.mxu0 0
        %1556 = vmatpush1.bf16.msra.mxu0 0
        %1557 = vmatprep.subr.bf16.mxu0 0
        %1558 = vmatpush1.bf16.msra.mxu0 0
        %1559 = vmatprep.subr.bf16.mxu0 0
        %1560 = vmatpush1.bf16.msra.mxu0 0
        %1561 = vmatprep.subr.bf16.mxu0 0
        %1562 = vmatpush1.bf16.msra.mxu0 0
        %1563 = vmatprep.subr.bf16.mxu0 0
        %1564 = vmatpush1.bf16.msra.mxu0 0
        %1565 = vmatprep.mubr.bf16.mxu0 0
        %1566 = vmatmul.mubr.bf16.gmra.mrb[0].mxu0 %v1461
        %v1567 = vpop.f32.mrb[0].mxu0
        %v1568 = vadd.f32 %v1483, %v1567
        %v1569 = vpop.f32.mrb[0].mxu0
        %v1570 = vpop.f32.mrb[0].mxu0
        %v1571 = vpop.f32.mrb[0].mxu0
        %1572 = vdwg.mxu0
        %v1573 = vadd.f32 %v1568, %v1359
        %1574 = vst.msk [vmem:[%s594] sm:$0xff] %vm608, %v1573
        %s1575 = sand.u32 %s429, 1
        %s1576 = scalar_lea.sflag [#allocation5], %s1575
        %s1577 = sand.u32 %s429, 1
        %s1578 = smul.addr %s1577, 8
        %s1579 = scalar_lea.vmem [#allocation6], %s1578
        // Predicated region
        $region97: #{tpu_custom_call.1} parent=91 // pred_check
          %p1580 = pneg %p439
        $region98: #{tpu_custom_call.1} parent=91 // pred_check_branch
          %1582 = sbr.rel (%p1580) target = $region100
        $region99: #{tpu_custom_call.1} parent=91 // pred_region
          %s1584 = ssub.s32 128, 128
          %1585 = vsyncadd %s1576, %s1584
          %s1586 = smul.addr %s33, 128
          %s1587 = scalar_lea.hbm %s18, %s1586
          %s1589 = sshll.u32 %s1579, 4
          %s1590 = int_to_ptr.vmem [resolvable:$true] %s1589
          %1592 = dma.vmem_to_hbm [thread:$0]  %s1590, 128, %s1587, %s1576
        $region100: #{tpu_custom_call.1} parent=91 // pred_fallthru
          _
      $region92: #{tpu_custom_call.1} parent=5 // pred_fallthru
        _
      %p1593 = scmp.le.s32.totalorder 2, %s28
      // Predicated region
      $region101: #{tpu_custom_call.1} parent=5 // pred_check
        %p1594 = pneg %p1593
      $region102: #{tpu_custom_call.1} parent=5 // pred_check_branch
        %1596 = sbr.rel (%p1594) target = $region104
      $region103: #{tpu_custom_call.1} parent=5 // pred_region
        %s1597 = ssub.s32 %s28, 2
        // Predicated region
        $region105: #{tpu_custom_call.1} parent=103 // pred_check
          %p1598 = pneg %p445
        $region106: #{tpu_custom_call.1} parent=103 // pred_check_branch
          %1600 = sbr.rel (%p1598) target = $region108
        $region107: #{tpu_custom_call.1} parent=103 // pred_region
          %s1601 = sand.u32 %s430, 1
          %s1602 = scalar_lea.sflag [#allocation5], %s1601
          %s1603 = sand.u32 %s430, 1
          %s1604 = smul.addr %s1603, 8
          %s1605 = scalar_lea.vmem [#allocation6], %s1604
          %1606 = dma.done %s1602, 128
        $region108: #{tpu_custom_call.1} parent=103 // pred_fallthru
          _
      $region104: #{tpu_custom_call.1} parent=5 // pred_fallthru
        _
    $region6: #{tpu_custom_call.1} parent=1 // loop_footer
      %s32 = sadd.s32 1, %s28
    $region7: #{tpu_custom_call.1} parent=1 // loop_footer_branch
      %27 = sbr.rel target = $region3
    $region8: #{tpu_custom_call.1} parent=1 // loop_exit
      _
    %1607 = vsyncpa [#allocation4], 1
    %s1608 = scalar_lea.sflag [#allocation4], 1
    %1609 = vsyncpa %s1608, 1
    %1610 = vsyncpa [#allocation5], 1
    %s1611 = scalar_lea.sflag [#allocation5], 1
    %1612 = vsyncpa %s1611, 1

</llo_original>
